<compile_context>
chip_gen: v6e
topology: v6e:2x2x1
jax: 0.10.0
libtpu: 0.0.40
codegen_flags: <defaults>
</compile_context>

<pallas_src>
import jax
import jax.numpy as jnp
from jax.experimental import pallas as pl
from jax.experimental.pallas import tpu as pltpu


def _seq_tile(S, max_tile=512):
    """Largest S-tile <= max_tile that is a multiple of 8 and divides S."""
    if S <= max_tile:
        return S
    t = (max_tile // 8) * 8
    while t >= 8:
        if S % t == 0:
            return t
        t -= 8
    return S  # fallback: no tiling


def _batch_tile(B):
    """Batch tile: must be a multiple of 8 or equal B (sublane constraint)."""
    if B <= 8 or B % 8 != 0:
        return B
    return 8


def neuralnet_head(hidden_states, weights, fc_w, fc_b):
    """hidden_states [L,B,S,H], weights [L,1], fc_w [C, 2H], fc_b [C] -> [B, C]."""
    L, B, S, H = hidden_states.shape
    C = fc_w.shape[0]

    # --- Only the bytes the head reads (XLA slices, outside the kernel) -----
    cls_states = hidden_states[:, :, 0, :]   # [L, B, H]
    last_hidden = hidden_states[-1]          # [B, S, H]

    # --- Layer-attention softmax: sums over the FULL batch -> hoisted -------
    logits = (jnp.sum(cls_states.astype(jnp.float32), axis=(1, 2))
              * weights.reshape(L).astype(jnp.float32))          # [L]
    atten = jax.nn.softmax(logits).reshape(L, 1)                 # [L, 1]

    # --- fc weights: split halves (no concat), transpose, lane-pad C -> 128 -
    C_pad = max(128, ((C + 127) // 128) * 128)
    w1 = jnp.zeros((H, C_pad), jnp.float32).at[:, :C].set(fc_w[:, :H].T.astype(jnp.float32))
    w2 = jnp.zeros((H, C_pad), jnp.float32).at[:, :C].set(fc_w[:, H:].T.astype(jnp.float32))
    bb = jnp.zeros((1, C_pad), jnp.float32).at[:, :C].set(fc_b.reshape(1, C).astype(jnp.float32))

    # --- Tiling --------------------------------------------------------------
    TS = _seq_tile(S)
    TB = _batch_tile(B)
    nb, ns = B // TB, S // TS
    inv_seq = 1.0 / float(S)

    def head_kernel(cls_ref, lh_ref, atten_ref, w1_ref, w2_ref, b_ref,
                    out_ref, acc_ref):
        si = pl.program_id(1)

        @pl.when(si == 0)
        def _():
            acc_ref[...] = jnp.zeros_like(acc_ref)

        # Accumulate the seq-sum of this last_hidden tile: [TB, TS, H] -> [TB, H]
        acc_ref[...] += jnp.sum(lh_ref[...].astype(jnp.float32), axis=1)

        @pl.when(si == pl.num_programs(1) - 1)
        def _():
            f = acc_ref[...] * inv_seq                              # mean over seq
            cls = cls_ref[...].astype(jnp.float32)                  # [L, TB, H]
            att = atten_ref[...]                                    # [L, 1]
            feature = jnp.sum(cls * att[:, :, None], axis=0)        # [TB, H]
            # fc(concat(feature, f)) == feature @ W1 + f @ W2 + b
            h = (jnp.dot(feature, w1_ref[...], preferred_element_type=jnp.float32)
                 + jnp.dot(f, w2_ref[...], preferred_element_type=jnp.float32)
                 + b_ref[...])
            out_ref[...] = h

    # --- VMEM budget (double-buffered inputs + scratch + weights) -----------
    it = 4
    est = it * (2 * TB * TS * H          # last_hidden tiles (double buffered)
                + 2 * L * TB * H         # cls slab
                + 2 * TB * C_pad         # output
                + TB * H                 # accumulator scratch
                + 2 * (2 * H * C_pad + C_pad + L))
    vmem_limit = int(min(max(est + (4 << 20), 16 << 20), 64 << 20))

    out_pad = pl.pallas_call(
        head_kernel,
        out_shape=jax.ShapeDtypeStruct((B, C_pad), jnp.float32),
        grid_spec=pltpu.PrefetchScalarGridSpec(
            num_scalar_prefetch=0,
            grid=(nb, ns),
            in_specs=[
                pl.BlockSpec((L, TB, H), lambda bi, si: (0, bi, 0)),    # cls
                pl.BlockSpec((TB, TS, H), lambda bi, si: (bi, si, 0)),  # last_hidden
                pl.BlockSpec((L, 1), lambda bi, si: (0, 0)),            # atten
                pl.BlockSpec((H, C_pad), lambda bi, si: (0, 0)),        # W1
                pl.BlockSpec((H, C_pad), lambda bi, si: (0, 0)),        # W2
                pl.BlockSpec((1, C_pad), lambda bi, si: (0, 0)),        # bias
            ],
            out_specs=pl.BlockSpec((TB, C_pad), lambda bi, si: (bi, 0)),
            scratch_shapes=[pltpu.VMEM((TB, H), jnp.float32)],
        ),
        compiler_params=pltpu.CompilerParams(
            dimension_semantics=("parallel", "arbitrary"),
            vmem_limit_bytes=vmem_limit,
        ),
    )(cls_states, last_hidden, atten, w1, w2, bb)

    return out_pad[:, :C]


def reference_head(hidden_states, weights, fc_w, fc_b):
    """Pure-JAX reference mirroring the PyTorch forward (eval mode)."""
    L, B, S, H = hidden_states.shape
    ht_cls = hidden_states[:, :, :1, :]                                   # [13,B,1,H]
    atten = jnp.sum(ht_cls * weights.reshape(L, 1, 1, 1), axis=(1, 3))    # [13,1]
    atten = jax.nn.softmax(atten.reshape(-1), axis=0)                     # [13]
    feature = jnp.sum(ht_cls * atten.reshape(L, 1, 1, 1), axis=(0, 2))    # [B,H]
    f = jnp.mean(hidden_states[-1], axis=1)                               # [B,H]
    feat = jnp.concatenate([feature, f], axis=1)                          # [B,2H]
    h = feat @ fc_w.T + fc_b                                              # [B,C]
    return h                                                              # 5x dropout avg == h in eval


if __name__ == "__main__":
    # 13 hidden states (12 layers + embeddings), hidden_size=768, num_class=2;
    # small batch=2, seq=8 for the self-test.
    L, B, S, H, C = 13, 2, 8, 768, 2
    key = jax.random.PRNGKey(0)
    k_hs, k_w, k_fw, k_fb = jax.random.split(key, 4)

    hidden_states = jax.random.normal(k_hs, (L, B, S, H), dtype=jnp.float32) * 0.05
    weights = jax.random.uniform(k_w, (L, 1), dtype=jnp.float32)          # torch.rand(13,1)
    bound = 1.0 / jnp.sqrt(2.0 * H)
    fc_w = jax.random.uniform(k_fw, (C, 2 * H), dtype=jnp.float32,
                              minval=-bound, maxval=bound)                # nn.Linear weight
    fc_b = jax.random.uniform(k_fb, (C,), dtype=jnp.float32,
                              minval=-bound, maxval=bound)                # nn.Linear bias

    out = neuralnet_head(hidden_states, weights, fc_w, fc_b)
    out = jax.block_until_ready(out)

    ref = reference_head(hidden_states, weights, fc_w, fc_b)
    assert out.shape == (B, C)
    assert jnp.allclose(out, ref, atol=1e-4, rtol=1e-4), (out, ref)

    print("KERNEL_OK")
</pallas_src>

<mosaic_0001>
module attributes {stable_mosaic.version = 11 : i64} {
  func.func @head_kernel(%arg0: i32, %arg1: i32, %arg2: memref<13x2x768xf32, #tpu.memory_space<vmem>>, %arg3: memref<2x8x768xf32, #tpu.memory_space<vmem>>, %arg4: memref<13x1xf32, #tpu.memory_space<vmem>>, %arg5: memref<768x128xf32, #tpu.memory_space<vmem>>, %arg6: memref<768x128xf32, #tpu.memory_space<vmem>>, %arg7: memref<1x128xf32, #tpu.memory_space<vmem>>, %arg8: memref<2x128xf32, #tpu.memory_space<vmem>>, %arg9: memref<2x768xf32, #tpu.memory_space<vmem>>) attributes {dimension_semantics = [#tpu.dimension_semantics<parallel>, #tpu.dimension_semantics<arbitrary>], iteration_bounds = array<i64: 1, 1>, scalar_prefetch = 0 : i64, scratch_operands = 1 : i64, tpu.core_type = #tpu.core_type<tc>, window_params = [{transform_indices = @transform_0, window_bounds = array<i64: 13, 2, 768>}, {transform_indices = @transform_1, window_bounds = array<i64: 2, 8, 768>}, {pipeline_mode = #tpu.pipeline_mode<synchronous>, transform_indices = @transform_2, window_bounds = array<i64: 13, 1>}, {pipeline_mode = #tpu.pipeline_mode<synchronous>, transform_indices = @transform_3, window_bounds = array<i64: 768, 128>}, {pipeline_mode = #tpu.pipeline_mode<synchronous>, transform_indices = @transform_4, window_bounds = array<i64: 768, 128>}, {pipeline_mode = #tpu.pipeline_mode<synchronous>, transform_indices = @transform_5, window_bounds = array<i64: 1, 128>}, {transform_indices = @transform_6, window_bounds = array<i64: 2, 128>}]} {
    %c0_i32 = arith.constant 0 : i32
    %0 = arith.cmpi eq, %arg1, %c0_i32 : i32
    %1 = arith.extui %0 : i1 to i32
    %c0_i32_0 = arith.constant 0 : i32
    %2 = arith.cmpi ne, %1, %c0_i32_0 : i32
    scf.if %2 {
      %cst_9 = arith.constant 0.000000e+00 : f32
      %11 = vector.broadcast %cst_9 : f32 to vector<2x768xf32>
      %c0_10 = arith.constant 0 : index
      %c0_11 = arith.constant 0 : index
      %12 = vector.load %arg9[%c0_10, %c0_11] : memref<2x768xf32, #tpu.memory_space<vmem>>, vector<2x768xf32>
      tpu.vector_store %arg9[%c0_10, %c0_11], %11 {strides = array<i32>} : memref<2x768xf32, #tpu.memory_space<vmem>>, vector<2x768xf32>,
    } else {
    }
    %c0 = arith.constant 0 : index
    %c0_1 = arith.constant 0 : index
    %3 = vector.load %arg9[%c0, %c0_1] : memref<2x768xf32, #tpu.memory_space<vmem>>, vector<2x768xf32>
    %c0_2 = arith.constant 0 : index
    %c0_3 = arith.constant 0 : index
    %c0_4 = arith.constant 0 : index
    %4 = vector.load %arg3[%c0_2, %c0_3, %c0_4] : memref<2x8x768xf32, #tpu.memory_space<vmem>>, vector<2x8x768xf32>
    %cst = arith.constant dense<0.000000e+00> : vector<2x768xf32>
    %5 = vector.multi_reduction <add>, %4, %cst [1] : vector<2x8x768xf32> to vector<2x768xf32>
    %6 = arith.addf %3, %5 : vector<2x768xf32>
    %c0_5 = arith.constant 0 : index
    %c0_6 = arith.constant 0 : index
    %7 = vector.load %arg9[%c0_5, %c0_6] : memref<2x768xf32, #tpu.memory_space<vmem>>, vector<2x768xf32>
    tpu.vector_store %arg9[%c0_5, %c0_6], %6 {strides = array<i32>} : memref<2x768xf32, #tpu.memory_space<vmem>>, vector<2x768xf32>,
    %c0_i32_7 = arith.constant 0 : i32
    %8 = arith.cmpi eq, %arg1, %c0_i32_7 : i32
    %9 = arith.extui %8 : i1 to i32
    %c0_i32_8 = arith.constant 0 : i32
    %10 = arith.cmpi ne, %9, %c0_i32_8 : i32
    scf.if %10 {
      %c0_9 = arith.constant 0 : index
      %c0_10 = arith.constant 0 : index
      %11 = vector.load %arg9[%c0_9, %c0_10] : memref<2x768xf32, #tpu.memory_space<vmem>>, vector<2x768xf32>
      %cst_11 = arith.constant 1.250000e-01 : f32
      %12 = vector.broadcast %cst_11 : f32 to vector<2x768xf32>
      %13 = arith.mulf %11, %12 : vector<2x768xf32>
      %c0_12 = arith.constant 0 : index
      %c0_13 = arith.constant 0 : index
      %c0_14 = arith.constant 0 : index
      %14 = vector.load %arg2[%c0_12, %c0_13, %c0_14] : memref<13x2x768xf32, #tpu.memory_space<vmem>>, vector<13x2x768xf32>
      %c0_15 = arith.constant 0 : index
      %c0_16 = arith.constant 0 : index
      %15 = vector.load %arg4[%c0_15, %c0_16] : memref<13x1xf32, #tpu.memory_space<vmem>>, vector<13x1xf32>
      %16 = vector.shape_cast %15 : vector<13x1xf32> to vector<13x1x1xf32>
      %17 = vector.broadcast %16 : vector<13x1x1xf32> to vector<13x2x768xf32>
      %18 = arith.mulf %14, %17 : vector<13x2x768xf32>
      %cst_17 = arith.constant dense<0.000000e+00> : vector<2x768xf32>
      %19 = vector.multi_reduction <add>, %18, %cst_17 [0] : vector<13x2x768xf32> to vector<2x768xf32>
      %c0_18 = arith.constant 0 : index
      %c0_19 = arith.constant 0 : index
      %20 = vector.load %arg5[%c0_18, %c0_19] : memref<768x128xf32, #tpu.memory_space<vmem>>, vector<768x128xf32>
      %cst_20 = arith.constant dense<0.000000e+00> : vector<2x128xf32>
      %21 = tpu.matmul %19, %20, %cst_20 {dimension_numbers = #tpu.dot_dimension_numbers<[1], [0], [0], [1], [0, 0, 1, 1], [], []>} : vector<2x768xf32>, vector<768x128xf32>, vector<2x128xf32> -> vector<2x128xf32>
      %c0_21 = arith.constant 0 : index
      %c0_22 = arith.constant 0 : index
      %22 = vector.load %arg6[%c0_21, %c0_22] : memref<768x128xf32, #tpu.memory_space<vmem>>, vector<768x128xf32>
      %cst_23 = arith.constant dense<0.000000e+00> : vector<2x128xf32>
      %23 = tpu.matmul %13, %22, %cst_23 {dimension_numbers = #tpu.dot_dimension_numbers<[1], [0], [0], [1], [0, 0, 1, 1], [], []>} : vector<2x768xf32>, vector<768x128xf32>, vector<2x128xf32> -> vector<2x128xf32>
      %24 = arith.addf %21, %23 : vector<2x128xf32>
      %c0_24 = arith.constant 0 : index
      %c0_25 = arith.constant 0 : index
      %25 = vector.load %arg7[%c0_24, %c0_25] : memref<1x128xf32, #tpu.memory_space<vmem>>, vector<1x128xf32>
      %26 = vector.broadcast %25 : vector<1x128xf32> to vector<2x128xf32>
      %27 = arith.addf %24, %26 : vector<2x128xf32>
      %c0_26 = arith.constant 0 : index
      %c0_27 = arith.constant 0 : index
      %28 = vector.load %arg8[%c0_26, %c0_27] : memref<2x128xf32, #tpu.memory_space<vmem>>, vector<2x128xf32>
      tpu.vector_store %arg8[%c0_26, %c0_27], %27 {strides = array<i32>} : memref<2x128xf32, #tpu.memory_space<vmem>>, vector<2x128xf32>,
    } else {
    }
    return
  }
  func.func @transform_0(%arg0: i32, %arg1: i32) -> (i32, i32, i32) {
    %c0_i32 = arith.constant 0 : i32
    %c0_i32_0 = arith.constant 0 : i32
    %c0_i32_1 = arith.constant 0 : i32
    return %c0_i32, %arg0, %c0_i32_0 : i32, i32, i32
  }
  func.func @transform_1(%arg0: i32, %arg1: i32) -> (i32, i32, i32) {
    %c0_i32 = arith.constant 0 : i32
    %c0_i32_0 = arith.constant 0 : i32
    return %arg0, %arg1, %c0_i32 : i32, i32, i32
  }
  func.func @transform_2(%arg0: i32, %arg1: i32) -> (i32, i32) {
    %c0_i32 = arith.constant 0 : i32
    %c0_i32_0 = arith.constant 0 : i32
    %c0_i32_1 = arith.constant 0 : i32
    return %c0_i32, %c0_i32_0 : i32, i32
  }
  func.func @transform_3(%arg0: i32, %arg1: i32) -> (i32, i32) {
    %c0_i32 = arith.constant 0 : i32
    %c0_i32_0 = arith.constant 0 : i32
    %c0_i32_1 = arith.constant 0 : i32
    return %c0_i32, %c0_i32_0 : i32, i32
  }
  func.func @transform_4(%arg0: i32, %arg1: i32) -> (i32, i32) {
    %c0_i32 = arith.constant 0 : i32
    %c0_i32_0 = arith.constant 0 : i32
    %c0_i32_1 = arith.constant 0 : i32
    return %c0_i32, %c0_i32_0 : i32, i32
  }
  func.func @transform_5(%arg0: i32, %arg1: i32) -> (i32, i32) {
    %c0_i32 = arith.constant 0 : i32
    %c0_i32_0 = arith.constant 0 : i32
    %c0_i32_1 = arith.constant 0 : i32
    return %c0_i32, %c0_i32_0 : i32, i32
  }
  func.func @transform_6(%arg0: i32, %arg1: i32) -> (i32, i32) {
    %c0_i32 = arith.constant 0 : i32
    %c0_i32_0 = arith.constant 0 : i32
    return %arg0, %c0_i32 : i32, i32
  }
}

</mosaic_0001>

<llo_original>
// kernel: tpu_custom_call.1
$region0: #{tpu_custom_call.1}
  #allocation0 [shape = 'u32[]', space=smem, size = 0x4, offset = 0x4, fixed_abs, tag = 'smem constant byte address 0x4 - core index']
  #allocation1 [shape = 'u32[144,128]{1,0:T(1,128)}', space=vmem, size = 0x12000, scoped, tag = 'internal scratch']
  #allocation2 [shape = 'f32[2,768]{1,0:T(2,128)}', space=vmem, size = 0x1800, scoped, tag = 'scratch operand']
  %s0 = inlined_call_operand.hbm [shape: f32[13,2,768], index: 0, kind: input, shape index: {}]
  %s1 = inlined_call_operand.hbm [shape: f32[2,8,768], index: 1, kind: input, shape index: {}]
  %s2 = inlined_call_operand.vmem [shape: f32[13,1], index: 2, kind: input, shape index: {}]
  %s3 = inlined_call_operand.hbm [shape: f32[768,128], index: 3, kind: input, shape index: {}]
  %s4 = inlined_call_operand.hbm [shape: f32[768,128], index: 4, kind: input, shape index: {}]
  %s5 = inlined_call_operand.vmem [shape: f32[1,128], index: 5, kind: input, shape index: {}]
  %s6 = inlined_call_operand.hbm [shape: f32[2,128], index: 6, kind: output, shape index: {}]
  %s7 = sld [smem:[#allocation0]]
  $region58: #{tpu_custom_call.1} parent=0
    _
  %s9 = ssub.s32 1, %s7
  %s10 = scalar_select 0, %s9, %s7
  $region1: #{tpu_custom_call.1} parent=0
    #allocation3 [shape = 'u8[79872]{0}', space=vmem, size = 0x13800, scoped, tag = 'input window, operand 0, single buffered']
    #allocation4 [shape = 's32[1]{0}', space=sflag, size = 0x4, scoped, tag = 'scoped memory for tpu_custom_call.1']
    #allocation5 [shape = 's32[1]{0}', space=sflag, size = 0x4, scoped, tag = 'scoped memory for tpu_custom_call.1']
    #allocation6 [shape = 'u8[49152]{0}', space=vmem, size = 0xc000, scoped, tag = 'input window, operand 1, single buffered']
    #allocation7 [shape = 's32[1]{0}', space=sflag, size = 0x4, scoped, tag = 'scoped memory for tpu_custom_call.1']
    #allocation8 [shape = 'u8[393216]{0}', space=vmem, size = 0x60000, scoped, tag = 'input window, operand 3, single buffered']
    #allocation9 [shape = 'u8[393216]{0}', space=vmem, size = 0x60000, scoped, tag = 'input window, operand 4, single buffered']
    #allocation10 [shape = 's32[1]{0}', space=sflag, size = 0x4, scoped, tag = 'scoped memory for tpu_custom_call.1']
    #allocation11 [shape = 'u8[1024]{0}', space=vmem, size = 0x400, scoped, tag = 'output window, operand 0, single buffered']
    %11 = vsyncpa [#allocation4], 0
    %12 = vsyncpa [#allocation7], 0
    %13 = vsyncpa [#allocation10], 0
    %14 = vsyncpa [#allocation5], 0
    // Predicated region
    $region2: #{tpu_custom_call.1} parent=1 // pred_check
      _
    $region3: #{tpu_custom_call.1} parent=1 // pred_check_branch
      %16 = sbr.rel (0) target = $region5
    $region4: #{tpu_custom_call.1} parent=1 // pred_region
      %s18 = ssub.s32 2496, 2496
      %19 = vsyncadd [#allocation4], %s18
      %s20 = sshll.u32 [#allocation3], 4
      %s21 = int_to_ptr.vmem [resolvable:$true] %s20
      %26 = dma.hbm_to_vmem [thread:$0]  %s0, 2496, %s21, [#allocation4], 192, 192, 12
    $region5: #{tpu_custom_call.1} parent=1 // pred_fallthru
      _
    // Predicated region
    $region6: #{tpu_custom_call.1} parent=1 // pred_check
      _
    $region7: #{tpu_custom_call.1} parent=1 // pred_check_branch
      %28 = sbr.rel (0) target = $region9
    $region8: #{tpu_custom_call.1} parent=1 // pred_region
      %s30 = ssub.s32 1536, 1536
      %31 = vsyncadd [#allocation7], %s30
      %s32 = sshll.u32 [#allocation6], 4
      %s33 = int_to_ptr.vmem [resolvable:$true] %s32
      %38 = dma.hbm_to_vmem [thread:$0]  %s1, 1536, %s33, [#allocation7], 768, 768, 48
    $region9: #{tpu_custom_call.1} parent=1 // pred_fallthru
      _
    // Predicated region
    $region10: #{tpu_custom_call.1} parent=1 // pred_check
      _
    $region11: #{tpu_custom_call.1} parent=1 // pred_check_branch
      %40 = sbr.rel (0) target = $region13
    $region12: #{tpu_custom_call.1} parent=1 // pred_region
      _
    $region13: #{tpu_custom_call.1} parent=1 // pred_fallthru
      _
    // Predicated region
    $region14: #{tpu_custom_call.1} parent=1 // pred_check
      _
    $region15: #{tpu_custom_call.1} parent=1 // pred_check_branch
      %42 = sbr.rel (0) target = $region17
    $region16: #{tpu_custom_call.1} parent=1 // pred_region
      %s44 = ssub.s32 12288, 12288
      %45 = vsyncadd [#allocation7], %s44
      %s46 = sshll.u32 [#allocation8], 4
      %s47 = int_to_ptr.vmem [resolvable:$true] %s46
      %52 = dma.hbm_to_vmem [thread:$0]  %s3, 12288, %s47, [#allocation7], 128, 128, 8
    $region17: #{tpu_custom_call.1} parent=1 // pred_fallthru
      _
    // Predicated region
    $region18: #{tpu_custom_call.1} parent=1 // pred_check
      _
    $region19: #{tpu_custom_call.1} parent=1 // pred_check_branch
      %54 = sbr.rel (0) target = $region21
    $region20: #{tpu_custom_call.1} parent=1 // pred_region
      %s56 = ssub.s32 12288, 12288
      %57 = vsyncadd [#allocation10], %s56
      %s58 = sshll.u32 [#allocation9], 4
      %s59 = int_to_ptr.vmem [resolvable:$true] %s58
      %64 = dma.hbm_to_vmem [thread:$0]  %s4, 12288, %s59, [#allocation10], 128, 128, 8
    $region21: #{tpu_custom_call.1} parent=1 // pred_fallthru
      _
    // Predicated region
    $region22: #{tpu_custom_call.1} parent=1 // pred_check
      _
    $region23: #{tpu_custom_call.1} parent=1 // pred_check_branch
      %66 = sbr.rel (0) target = $region25
    $region24: #{tpu_custom_call.1} parent=1 // pred_region
      _
    $region25: #{tpu_custom_call.1} parent=1 // pred_fallthru
      _
    // Predicated region
    $region26: #{tpu_custom_call.1} parent=1 // pred_check
      _
    $region27: #{tpu_custom_call.1} parent=1 // pred_check_branch
      %68 = sbr.rel (0) target = $region29
    $region28: #{tpu_custom_call.1} parent=1 // pred_region
      %69 = dma.done [#allocation4], 2496
    $region29: #{tpu_custom_call.1} parent=1 // pred_fallthru
      _
    // Predicated region
    $region30: #{tpu_custom_call.1} parent=1 // pred_check
      _
    $region31: #{tpu_custom_call.1} parent=1 // pred_check_branch
      %71 = sbr.rel (0) target = $region33
    $region32: #{tpu_custom_call.1} parent=1 // pred_region
      %72 = dma.done [#allocation7], 1536
    $region33: #{tpu_custom_call.1} parent=1 // pred_fallthru
      _
    // Predicated region
    $region34: #{tpu_custom_call.1} parent=1 // pred_check
      _
    $region35: #{tpu_custom_call.1} parent=1 // pred_check_branch
      %74 = sbr.rel (0) target = $region37
    $region36: #{tpu_custom_call.1} parent=1 // pred_region
      %75 = dma.done [#allocation7], 12288
    $region37: #{tpu_custom_call.1} parent=1 // pred_fallthru
      _
    // Predicated region
    $region38: #{tpu_custom_call.1} parent=1 // pred_check
      _
    $region39: #{tpu_custom_call.1} parent=1 // pred_check_branch
      %77 = sbr.rel (0) target = $region41
    $region40: #{tpu_custom_call.1} parent=1 // pred_region
      %78 = dma.done [#allocation10], 12288
    $region41: #{tpu_custom_call.1} parent=1 // pred_fallthru
      _
    %p79 = scmp.eq.s32.totalorder 0, 0
    // Predicated region
    $region42: #{tpu_custom_call.1} parent=1 // pred_check
      %p80 = pneg %p79
    $region43: #{tpu_custom_call.1} parent=1 // pred_check_branch
      %82 = sbr.rel (%p80) target = $region45
    $region44: #{tpu_custom_call.1} parent=1 // pred_region
      %83 = vst [vmem:[#allocation2] sm:$0xff] 0.0
      %84 = vst [vmem:[#allocation2 + $0x8] sm:$0xf] 0.0
    $region45: #{tpu_custom_call.1} parent=1 // pred_fallthru
      _
    %v85 = vld [vmem:[#allocation2] sm:$0xff]
    %v86 = vld [vmem:[#allocation2 + $0x8] sm:$0xf]
    %v87 = vld [vmem:[#allocation6] sm:$0xff]
    %v88 = vld [vmem:[#allocation6 + $0x8] sm:$0xff]
    %v89 = vld [vmem:[#allocation6 + $0x10] sm:$0xff]
    %v90 = vld [vmem:[#allocation6 + $0x18] sm:$0xff]
    %v91 = vld [vmem:[#allocation6 + $0x20] sm:$0xff]
    %v92 = vld [vmem:[#allocation6 + $0x28] sm:$0xff]
    %v93 = vld [vmem:[#allocation6 + $0x30] sm:$0xff]
    %v94 = vld [vmem:[#allocation6 + $0x38] sm:$0xff]
    %v95 = vld [vmem:[#allocation6 + $0x40] sm:$0xff]
    %v96 = vld [vmem:[#allocation6 + $0x48] sm:$0xff]
    %v97 = vld [vmem:[#allocation6 + $0x50] sm:$0xff]
    %v98 = vld [vmem:[#allocation6 + $0x58] sm:$0xff]
    %v99 = vrot.slane %v87, 4
    %v100 = vadd.f32 %v87, %v99
    %v101 = vrot.slane %v100, 2
    %v102 = vadd.f32 %v100, %v101
    %v103 = vrot.slane %v102, 1
    %v104 = vadd.f32 %v102, %v103
    %v105 = vrot.slane %v88, 4
    %v106 = vadd.f32 %v88, %v105
    %v107 = vrot.slane %v106, 2
    %v108 = vadd.f32 %v106, %v107
    %v109 = vrot.slane %v108, 1
    %v110 = vadd.f32 %v108, %v109
    %v111 = vrot.slane %v89, 4
    %v112 = vadd.f32 %v89, %v111
    %v113 = vrot.slane %v112, 2
    %v114 = vadd.f32 %v112, %v113
    %v115 = vrot.slane %v114, 1
    %v116 = vadd.f32 %v114, %v115
    %v117 = vrot.slane %v90, 4
    %v118 = vadd.f32 %v90, %v117
    %v119 = vrot.slane %v118, 2
    %v120 = vadd.f32 %v118, %v119
    %v121 = vrot.slane %v120, 1
    %v122 = vadd.f32 %v120, %v121
    %v123 = vrot.slane %v91, 4
    %v124 = vadd.f32 %v91, %v123
    %v125 = vrot.slane %v124, 2
    %v126 = vadd.f32 %v124, %v125
    %v127 = vrot.slane %v126, 1
    %v128 = vadd.f32 %v126, %v127
    %v129 = vrot.slane %v92, 4
    %v130 = vadd.f32 %v92, %v129
    %v131 = vrot.slane %v130, 2
    %v132 = vadd.f32 %v130, %v131
    %v133 = vrot.slane %v132, 1
    %v134 = vadd.f32 %v132, %v133
    %v135 = vrot.slane %v93, 4
    %v136 = vadd.f32 %v93, %v135
    %v137 = vrot.slane %v136, 2
    %v138 = vadd.f32 %v136, %v137
    %v139 = vrot.slane %v138, 1
    %v140 = vadd.f32 %v138, %v139
    %v141 = vrot.slane %v94, 4
    %v142 = vadd.f32 %v94, %v141
    %v143 = vrot.slane %v142, 2
    %v144 = vadd.f32 %v142, %v143
    %v145 = vrot.slane %v144, 1
    %v146 = vadd.f32 %v144, %v145
    %v147 = vrot.slane %v95, 4
    %v148 = vadd.f32 %v95, %v147
    %v149 = vrot.slane %v148, 2
    %v150 = vadd.f32 %v148, %v149
    %v151 = vrot.slane %v150, 1
    %v152 = vadd.f32 %v150, %v151
    %v153 = vrot.slane %v96, 4
    %v154 = vadd.f32 %v96, %v153
    %v155 = vrot.slane %v154, 2
    %v156 = vadd.f32 %v154, %v155
    %v157 = vrot.slane %v156, 1
    %v158 = vadd.f32 %v156, %v157
    %v159 = vrot.slane %v97, 4
    %v160 = vadd.f32 %v97, %v159
    %v161 = vrot.slane %v160, 2
    %v162 = vadd.f32 %v160, %v161
    %v163 = vrot.slane %v162, 1
    %v164 = vadd.f32 %v162, %v163
    %v165 = vrot.slane %v98, 4
    %v166 = vadd.f32 %v98, %v165
    %v167 = vrot.slane %v166, 2
    %v168 = vadd.f32 %v166, %v167
    %v169 = vrot.slane %v168, 1
    %v170 = vadd.f32 %v168, %v169
    %v183 = vcombine.low %v104, %v110
    %v184 = vcombine.low %v116, %v122
    %v186 = vunpack.c.l.s4 1983009808
    %v187 = vunpack.c.0.s8 %v186
    %v188 = vlaneseq
    %v189 = vshrl.u32 %v188, 7
    %v190 = vsub.s32 %v187, %v189
    %v191 = vrot.slane %v183, %v190
    %v193 = vunpack.c.l.s4 1983009808
    %v194 = vunpack.c.0.s8 %v193
    %v195 = vlaneseq
    %v196 = vshrl.u32 %v195, 7
    %v197 = vsub.s32 %v194, %v196
    %v198 = vrot.slane %v184, %v197
    %v199 = vcombine.low %v191, %v198
    %v200 = vcombine.low %v128, %v134
    %v202 = vunpack.c.l.s4 1983009808
    %v203 = vunpack.c.0.s8 %v202
    %v204 = vlaneseq
    %v205 = vshrl.u32 %v204, 7
    %v206 = vsub.s32 %v203, %v205
    %v207 = vrot.slane %v200, %v206
    %v208 = vcombine.low %v140, %v146
    %v209 = vcombine.low %v152, %v158
    %v211 = vunpack.c.l.s4 1983009808
    %v212 = vunpack.c.0.s8 %v211
    %v213 = vlaneseq
    %v214 = vshrl.u32 %v213, 7
    %v215 = vsub.s32 %v212, %v214
    %v216 = vrot.slane %v208, %v215
    %v218 = vunpack.c.l.s4 1983009808
    %v219 = vunpack.c.0.s8 %v218
    %v220 = vlaneseq
    %v221 = vshrl.u32 %v220, 7
    %v222 = vsub.s32 %v219, %v221
    %v223 = vrot.slane %v209, %v222
    %v224 = vcombine.low %v216, %v223
    %v225 = vcombine.low %v164, %v170
    %v227 = vunpack.c.l.s4 1983009808
    %v228 = vunpack.c.0.s8 %v227
    %v229 = vlaneseq
    %v230 = vshrl.u32 %v229, 7
    %v231 = vsub.s32 %v228, %v230
    %v232 = vrot.slane %v225, %v231
    %vm233 = vcmask 1044484
    %v234 = vsel %vm233, %v199, %v199
    %vm235 = vcmask 1046534
    %v236 = vsel %vm235, %v199, %v234
    %v237 = vrot.slane %v224, 7
    %vm238 = vcmask 1041409
    %v239 = vsel %vm238, %v237, %v236
    %vm240 = vcmask 1043459
    %v241 = vsel %vm240, %v237, %v239
    %vm242 = vcmask 1045509
    %v243 = vsel %vm242, %v237, %v241
    %vm244 = vcmask 1047559
    %v245 = vsel %vm244, %v237, %v243
    %v246 = vsel %vm233, %v207, %v207
    %v247 = vsel %vm235, %v207, %v246
    %v248 = vrot.slane %v232, 7
    %v249 = vsel %vm238, %v248, %v247
    %v250 = vsel %vm240, %v248, %v249
    %v251 = vsel %vm242, %v248, %v250
    %v252 = vsel %vm244, %v248, %v251
    %v255 = vadd.f32 %v85, %v245
    %v256 = vadd.f32 %v86, %v252
    %257 = vst [vmem:[#allocation2] sm:$0xff] %v255
    %258 = vst [vmem:[#allocation2 + $0x8] sm:$0xf] %v256
    // Predicated region
    $region46: #{tpu_custom_call.1} parent=1 // pred_check
      %p259 = pneg %p79
    $region47: #{tpu_custom_call.1} parent=1 // pred_check_branch
      %261 = sbr.rel (%p259) target = $region49
    $region48: #{tpu_custom_call.1} parent=1 // pred_region
      %v262 = vld [vmem:[#allocation2] sm:$0xff]
      %v263 = vld [vmem:[#allocation2 + $0x8] sm:$0xf]
      %v264 = vmul.f32 %v262, 0.125
      %v265 = vmul.f32 %v263, 0.125
      %v266 = vld [vmem:[#allocation3] sm:$0xff]
      %v267 = vld [vmem:[#allocation3 + $0x8] sm:$0xf]
      %v268 = vld [vmem:[#allocation3 + $0xc] sm:$0xff]
      %v269 = vld [vmem:[#allocation3 + $0x14] sm:$0xf]
      %v270 = vld [vmem:[#allocation3 + $0x18] sm:$0xff]
      %v271 = vld [vmem:[#allocation3 + $0x20] sm:$0xf]
      %v272 = vld [vmem:[#allocation3 + $0x24] sm:$0xff]
      %v273 = vld [vmem:[#allocation3 + $0x2c] sm:$0xf]
      %v274 = vld [vmem:[#allocation3 + $0x30] sm:$0xff]
      %v275 = vld [vmem:[#allocation3 + $0x38] sm:$0xf]
      %v276 = vld [vmem:[#allocation3 + $0x3c] sm:$0xff]
      %v277 = vld [vmem:[#allocation3 + $0x44] sm:$0xf]
      %v278 = vld [vmem:[#allocation3 + $0x48] sm:$0xff]
      %v279 = vld [vmem:[#allocation3 + $0x50] sm:$0xf]
      %v280 = vld [vmem:[#allocation3 + $0x54] sm:$0xff]
      %v281 = vld [vmem:[#allocation3 + $0x5c] sm:$0xf]
      %v282 = vld [vmem:[#allocation3 + $0x60] sm:$0xff]
      %v283 = vld [vmem:[#allocation3 + $0x68] sm:$0xf]
      %v284 = vld [vmem:[#allocation3 + $0x6c] sm:$0xff]
      %v285 = vld [vmem:[#allocation3 + $0x74] sm:$0xf]
      %v286 = vld [vmem:[#allocation3 + $0x78] sm:$0xff]
      %v287 = vld [vmem:[#allocation3 + $0x80] sm:$0xf]
      %v288 = vld [vmem:[#allocation3 + $0x84] sm:$0xff]
      %v289 = vld [vmem:[#allocation3 + $0x8c] sm:$0xf]
      %v290 = vld [vmem:[#allocation3 + $0x90] sm:$0xff]
      %v291 = vld [vmem:[#allocation3 + $0x98] sm:$0xf]
      %v292 = vld [vmem:[%s2] sm:$0xff]
      %v293 = vld [vmem:[%s2 + $0x8] sm:$0x1f]
      %v296 = vcombine.high %v292, %v292
      %v298 = vunpack.c.l.s4 1966171168
      %v299 = vunpack.c.0.s8 %v298
      %v300 = vlaneseq
      %v301 = vshrl.u32 %v300, 7
      %v302 = vsub.s32 %v299, %v301
      %v303 = vrot.slane %v292, %v302
      %v305 = vunpack.c.l.s4 1966171168
      %v306 = vunpack.c.0.s8 %v305
      %v307 = vlaneseq
      %v308 = vshrl.u32 %v307, 7
      %v309 = vsub.s32 %v306, %v308
      %v310 = vrot.slane %v296, %v309
      %v311 = vcombine.high %v303, %v303
      %v312 = vcombine.high %v310, %v310
      %v314 = vunpack.c.l.s4 1966171168
      %v315 = vunpack.c.0.s8 %v314
      %v316 = vlaneseq
      %v317 = vshrl.u32 %v316, 7
      %v318 = vsub.s32 %v315, %v317
      %v319 = vrot.slane %v303, %v318
      %v321 = vunpack.c.l.s4 1966171168
      %v322 = vunpack.c.0.s8 %v321
      %v323 = vlaneseq
      %v324 = vshrl.u32 %v323, 7
      %v325 = vsub.s32 %v322, %v324
      %v326 = vrot.slane %v310, %v325
      %v328 = vunpack.c.l.s4 1966171168
      %v329 = vunpack.c.0.s8 %v328
      %v330 = vlaneseq
      %v331 = vshrl.u32 %v330, 7
      %v332 = vsub.s32 %v329, %v331
      %v333 = vrot.slane %v311, %v332
      %v335 = vunpack.c.l.s4 1966171168
      %v336 = vunpack.c.0.s8 %v335
      %v337 = vlaneseq
      %v338 = vshrl.u32 %v337, 7
      %v339 = vsub.s32 %v336, %v338
      %v340 = vrot.slane %v312, %v339
      %v341 = vcombine.high %v319, %v319
      %v342 = vcombine.high %v326, %v326
      %v343 = vcombine.high %v333, %v333
      %v344 = vcombine.high %v340, %v340
      %v345 = vcombine.high %v293, %v293
      %v347 = vunpack.c.l.s4 1966171168
      %v348 = vunpack.c.0.s8 %v347
      %v349 = vlaneseq
      %v350 = vshrl.u32 %v349, 7
      %v351 = vsub.s32 %v348, %v350
      %v352 = vrot.slane %v293, %v351
      %v354 = vunpack.c.l.s4 1966171168
      %v355 = vunpack.c.0.s8 %v354
      %v356 = vlaneseq
      %v357 = vshrl.u32 %v356, 7
      %v358 = vsub.s32 %v355, %v357
      %v359 = vrot.slane %v345, %v358
      %v360 = vcombine.high %v352, %v352
      %v362 = vunpack.c.l.s4 1966171168
      %v363 = vunpack.c.0.s8 %v362
      %v364 = vlaneseq
      %v365 = vshrl.u32 %v364, 7
      %v366 = vsub.s32 %v363, %v365
      %v367 = vrot.slane %v352, %v366
      %v369 = vunpack.c.l.s4 1966171168
      %v370 = vunpack.c.0.s8 %v369
      %v371 = vlaneseq
      %v372 = vshrl.u32 %v371, 7
      %v373 = vsub.s32 %v370, %v372
      %v374 = vrot.slane %v359, %v373
      %v376 = vunpack.c.l.s4 1966171168
      %v377 = vunpack.c.0.s8 %v376
      %v378 = vlaneseq
      %v379 = vshrl.u32 %v378, 7
      %v380 = vsub.s32 %v377, %v379
      %v381 = vrot.slane %v360, %v380
      %v382 = vcombine.high %v367, %v367
      %v383 = vcombine.high %v381, %v381
      %v384 = vlaneseq
      %v385 = vshrl.u32 %v384, 7
      %v386 = vsub.s32 0, %v385
      %v387 = vrot.slane %v319, %v386
      %v388 = vlaneseq
      %v389 = vshrl.u32 %v388, 7
      %v390 = vsub.s32 0, %v389
      %v391 = vrot.slane %v333, %v390
      %v392 = vlaneseq
      %v393 = vshrl.u32 %v392, 7
      %v394 = vsub.s32 0, %v393
      %v395 = vrot.slane %v341, %v394
      %v396 = vlaneseq
      %v397 = vshrl.u32 %v396, 7
      %v398 = vsub.s32 0, %v397
      %v399 = vrot.slane %v343, %v398
      %v400 = vlaneseq
      %v401 = vshrl.u32 %v400, 7
      %v402 = vsub.s32 0, %v401
      %v403 = vrot.slane %v326, %v402
      %v404 = vlaneseq
      %v405 = vshrl.u32 %v404, 7
      %v406 = vsub.s32 0, %v405
      %v407 = vrot.slane %v340, %v406
      %v408 = vlaneseq
      %v409 = vshrl.u32 %v408, 7
      %v410 = vsub.s32 0, %v409
      %v411 = vrot.slane %v342, %v410
      %v412 = vlaneseq
      %v413 = vshrl.u32 %v412, 7
      %v414 = vsub.s32 0, %v413
      %v415 = vrot.slane %v344, %v414
      %v416 = vlaneseq
      %v417 = vshrl.u32 %v416, 7
      %v418 = vsub.s32 0, %v417
      %v419 = vrot.slane %v367, %v418
      %v420 = vlaneseq
      %v421 = vshrl.u32 %v420, 7
      %v422 = vsub.s32 0, %v421
      %v423 = vrot.slane %v381, %v422
      %v424 = vlaneseq
      %v425 = vshrl.u32 %v424, 7
      %v426 = vsub.s32 0, %v425
      %v427 = vrot.slane %v382, %v426
      %v428 = vlaneseq
      %v429 = vshrl.u32 %v428, 7
      %v430 = vsub.s32 0, %v429
      %v431 = vrot.slane %v383, %v430
      %v432 = vlaneseq
      %v433 = vshrl.u32 %v432, 7
      %v434 = vsub.s32 0, %v433
      %v435 = vrot.slane %v374, %v434
      %436 = vset.pattern.permute.xlu0 0
      %437 = vperm.xlu0 %436, %v387
      %v438 = vpop.permute.xlu0 %437
      %440 = vset.pattern.permute.xlu0 0
      %441 = vperm.xlu0 %440, %v391
      %v442 = vpop.permute.xlu0 %441
      %444 = vset.pattern.permute.xlu0 0
      %445 = vperm.xlu0 %444, %v395
      %v446 = vpop.permute.xlu0 %445
      %448 = vset.pattern.permute.xlu0 0
      %449 = vperm.xlu0 %448, %v399
      %v450 = vpop.permute.xlu0 %449
      %452 = vset.pattern.permute.xlu0 0
      %453 = vperm.xlu0 %452, %v403
      %v454 = vpop.permute.xlu0 %453
      %456 = vset.pattern.permute.xlu0 0
      %457 = vperm.xlu0 %456, %v407
      %v458 = vpop.permute.xlu0 %457
      %460 = vset.pattern.permute.xlu0 0
      %461 = vperm.xlu0 %460, %v411
      %v462 = vpop.permute.xlu0 %461
      %464 = vset.pattern.permute.xlu0 0
      %465 = vperm.xlu0 %464, %v415
      %v466 = vpop.permute.xlu0 %465
      %468 = vset.pattern.permute.xlu0 0
      %469 = vperm.xlu0 %468, %v419
      %v470 = vpop.permute.xlu0 %469
      %472 = vset.pattern.permute.xlu0 0
      %473 = vperm.xlu0 %472, %v423
      %v474 = vpop.permute.xlu0 %473
      %476 = vset.pattern.permute.xlu0 0
      %477 = vperm.xlu0 %476, %v427
      %v478 = vpop.permute.xlu0 %477
      %480 = vset.pattern.permute.xlu0 0
      %481 = vperm.xlu0 %480, %v431
      %v482 = vpop.permute.xlu0 %481
      %484 = vset.pattern.permute.xlu0 0
      %485 = vperm.xlu0 %484, %v435
      %v486 = vpop.permute.xlu0 %485
      %v488 = vmul.f32 %v266, %v438
      %v489 = vmul.f32 %v267, %v438
      %v490 = vmul.f32 %v268, %v442
      %v491 = vmul.f32 %v269, %v442
      %v492 = vmul.f32 %v270, %v446
      %v493 = vmul.f32 %v271, %v446
      %v494 = vmul.f32 %v272, %v450
      %v495 = vmul.f32 %v273, %v450
      %v496 = vmul.f32 %v274, %v454
      %v497 = vmul.f32 %v275, %v454
      %v498 = vmul.f32 %v276, %v458
      %v499 = vmul.f32 %v277, %v458
      %v500 = vmul.f32 %v278, %v462
      %v501 = vmul.f32 %v279, %v462
      %v502 = vmul.f32 %v280, %v466
      %v503 = vmul.f32 %v281, %v466
      %v504 = vmul.f32 %v282, %v470
      %v505 = vmul.f32 %v283, %v470
      %v506 = vmul.f32 %v284, %v474
      %v507 = vmul.f32 %v285, %v474
      %v508 = vmul.f32 %v286, %v478
      %v509 = vmul.f32 %v287, %v478
      %v510 = vmul.f32 %v288, %v482
      %v511 = vmul.f32 %v289, %v482
      %v512 = vmul.f32 %v290, %v486
      %v513 = vmul.f32 %v291, %v486
      %v540 = vcombine.high %v488, %v488
      %v542 = vunpack.c.l.s4 1983009808
      %v543 = vunpack.c.0.s8 %v542
      %v544 = vlaneseq
      %v545 = vshrl.u32 %v544, 7
      %v546 = vsub.s32 %v543, %v545
      %v547 = vrot.slane %v488, %v546
      %v549 = vunpack.c.l.s4 1983009808
      %v550 = vunpack.c.0.s8 %v549
      %v551 = vlaneseq
      %v552 = vshrl.u32 %v551, 7
      %v553 = vsub.s32 %v550, %v552
      %v554 = vrot.slane %v540, %v553
      %v555 = vcombine.high %v547, %v547
      %v556 = vcombine.high %v554, %v554
      %v558 = vunpack.c.l.s4 1983009808
      %v559 = vunpack.c.0.s8 %v558
      %v560 = vlaneseq
      %v561 = vshrl.u32 %v560, 7
      %v562 = vsub.s32 %v559, %v561
      %v563 = vrot.slane %v489, %v562
      %v564 = vcombine.high %v563, %v563
      %v565 = vcombine.high %v490, %v490
      %v567 = vunpack.c.l.s4 1983009808
      %v568 = vunpack.c.0.s8 %v567
      %v569 = vlaneseq
      %v570 = vshrl.u32 %v569, 7
      %v571 = vsub.s32 %v568, %v570
      %v572 = vrot.slane %v490, %v571
      %v574 = vunpack.c.l.s4 1983009808
      %v575 = vunpack.c.0.s8 %v574
      %v576 = vlaneseq
      %v577 = vshrl.u32 %v576, 7
      %v578 = vsub.s32 %v575, %v577
      %v579 = vrot.slane %v565, %v578
      %v580 = vcombine.high %v572, %v572
      %v581 = vcombine.high %v579, %v579
      %v583 = vunpack.c.l.s4 1983009808
      %v584 = vunpack.c.0.s8 %v583
      %v585 = vlaneseq
      %v586 = vshrl.u32 %v585, 7
      %v587 = vsub.s32 %v584, %v586
      %v588 = vrot.slane %v491, %v587
      %v589 = vcombine.high %v588, %v588
      %v590 = vcombine.high %v492, %v492
      %v592 = vunpack.c.l.s4 1983009808
      %v593 = vunpack.c.0.s8 %v592
      %v594 = vlaneseq
      %v595 = vshrl.u32 %v594, 7
      %v596 = vsub.s32 %v593, %v595
      %v597 = vrot.slane %v492, %v596
      %v599 = vunpack.c.l.s4 1983009808
      %v600 = vunpack.c.0.s8 %v599
      %v601 = vlaneseq
      %v602 = vshrl.u32 %v601, 7
      %v603 = vsub.s32 %v600, %v602
      %v604 = vrot.slane %v590, %v603
      %v605 = vcombine.high %v597, %v597
      %v606 = vcombine.high %v604, %v604
      %v608 = vunpack.c.l.s4 1983009808
      %v609 = vunpack.c.0.s8 %v608
      %v610 = vlaneseq
      %v611 = vshrl.u32 %v610, 7
      %v612 = vsub.s32 %v609, %v611
      %v613 = vrot.slane %v493, %v612
      %v614 = vcombine.high %v613, %v613
      %v615 = vcombine.high %v494, %v494
      %v617 = vunpack.c.l.s4 1983009808
      %v618 = vunpack.c.0.s8 %v617
      %v619 = vlaneseq
      %v620 = vshrl.u32 %v619, 7
      %v621 = vsub.s32 %v618, %v620
      %v622 = vrot.slane %v494, %v621
      %v624 = vunpack.c.l.s4 1983009808
      %v625 = vunpack.c.0.s8 %v624
      %v626 = vlaneseq
      %v627 = vshrl.u32 %v626, 7
      %v628 = vsub.s32 %v625, %v627
      %v629 = vrot.slane %v615, %v628
      %v630 = vcombine.high %v622, %v622
      %v631 = vcombine.high %v629, %v629
      %v633 = vunpack.c.l.s4 1983009808
      %v634 = vunpack.c.0.s8 %v633
      %v635 = vlaneseq
      %v636 = vshrl.u32 %v635, 7
      %v637 = vsub.s32 %v634, %v636
      %v638 = vrot.slane %v495, %v637
      %v639 = vcombine.high %v638, %v638
      %v640 = vcombine.high %v496, %v496
      %v642 = vunpack.c.l.s4 1983009808
      %v643 = vunpack.c.0.s8 %v642
      %v644 = vlaneseq
      %v645 = vshrl.u32 %v644, 7
      %v646 = vsub.s32 %v643, %v645
      %v647 = vrot.slane %v496, %v646
      %v649 = vunpack.c.l.s4 1983009808
      %v650 = vunpack.c.0.s8 %v649
      %v651 = vlaneseq
      %v652 = vshrl.u32 %v651, 7
      %v653 = vsub.s32 %v650, %v652
      %v654 = vrot.slane %v640, %v653
      %v655 = vcombine.high %v647, %v647
      %v656 = vcombine.high %v654, %v654
      %v658 = vunpack.c.l.s4 1983009808
      %v659 = vunpack.c.0.s8 %v658
      %v660 = vlaneseq
      %v661 = vshrl.u32 %v660, 7
      %v662 = vsub.s32 %v659, %v661
      %v663 = vrot.slane %v497, %v662
      %v664 = vcombine.high %v663, %v663
      %v665 = vcombine.high %v498, %v498
      %v667 = vunpack.c.l.s4 1983009808
      %v668 = vunpack.c.0.s8 %v667
      %v669 = vlaneseq
      %v670 = vshrl.u32 %v669, 7
      %v671 = vsub.s32 %v668, %v670
      %v672 = vrot.slane %v498, %v671
      %v674 = vunpack.c.l.s4 1983009808
      %v675 = vunpack.c.0.s8 %v674
      %v676 = vlaneseq
      %v677 = vshrl.u32 %v676, 7
      %v678 = vsub.s32 %v675, %v677
      %v679 = vrot.slane %v665, %v678
      %v680 = vcombine.high %v672, %v672
      %v681 = vcombine.high %v679, %v679
      %v683 = vunpack.c.l.s4 1983009808
      %v684 = vunpack.c.0.s8 %v683
      %v685 = vlaneseq
      %v686 = vshrl.u32 %v685, 7
      %v687 = vsub.s32 %v684, %v686
      %v688 = vrot.slane %v499, %v687
      %v689 = vcombine.high %v688, %v688
      %v690 = vcombine.high %v500, %v500
      %v692 = vunpack.c.l.s4 1983009808
      %v693 = vunpack.c.0.s8 %v692
      %v694 = vlaneseq
      %v695 = vshrl.u32 %v694, 7
      %v696 = vsub.s32 %v693, %v695
      %v697 = vrot.slane %v500, %v696
      %v699 = vunpack.c.l.s4 1983009808
      %v700 = vunpack.c.0.s8 %v699
      %v701 = vlaneseq
      %v702 = vshrl.u32 %v701, 7
      %v703 = vsub.s32 %v700, %v702
      %v704 = vrot.slane %v690, %v703
      %v705 = vcombine.high %v697, %v697
      %v706 = vcombine.high %v704, %v704
      %v708 = vunpack.c.l.s4 1983009808
      %v709 = vunpack.c.0.s8 %v708
      %v710 = vlaneseq
      %v711 = vshrl.u32 %v710, 7
      %v712 = vsub.s32 %v709, %v711
      %v713 = vrot.slane %v501, %v712
      %v714 = vcombine.high %v713, %v713
      %v715 = vcombine.high %v502, %v502
      %v717 = vunpack.c.l.s4 1983009808
      %v718 = vunpack.c.0.s8 %v717
      %v719 = vlaneseq
      %v720 = vshrl.u32 %v719, 7
      %v721 = vsub.s32 %v718, %v720
      %v722 = vrot.slane %v502, %v721
      %v724 = vunpack.c.l.s4 1983009808
      %v725 = vunpack.c.0.s8 %v724
      %v726 = vlaneseq
      %v727 = vshrl.u32 %v726, 7
      %v728 = vsub.s32 %v725, %v727
      %v729 = vrot.slane %v715, %v728
      %v730 = vcombine.high %v722, %v722
      %v731 = vcombine.high %v729, %v729
      %v733 = vunpack.c.l.s4 1983009808
      %v734 = vunpack.c.0.s8 %v733
      %v735 = vlaneseq
      %v736 = vshrl.u32 %v735, 7
      %v737 = vsub.s32 %v734, %v736
      %v738 = vrot.slane %v503, %v737
      %v739 = vcombine.high %v738, %v738
      %v740 = vcombine.high %v504, %v504
      %v742 = vunpack.c.l.s4 1983009808
      %v743 = vunpack.c.0.s8 %v742
      %v744 = vlaneseq
      %v745 = vshrl.u32 %v744, 7
      %v746 = vsub.s32 %v743, %v745
      %v747 = vrot.slane %v504, %v746
      %v749 = vunpack.c.l.s4 1983009808
      %v750 = vunpack.c.0.s8 %v749
      %v751 = vlaneseq
      %v752 = vshrl.u32 %v751, 7
      %v753 = vsub.s32 %v750, %v752
      %v754 = vrot.slane %v740, %v753
      %v755 = vcombine.high %v747, %v747
      %v756 = vcombine.high %v754, %v754
      %v758 = vunpack.c.l.s4 1983009808
      %v759 = vunpack.c.0.s8 %v758
      %v760 = vlaneseq
      %v761 = vshrl.u32 %v760, 7
      %v762 = vsub.s32 %v759, %v761
      %v763 = vrot.slane %v505, %v762
      %v764 = vcombine.high %v763, %v763
      %v765 = vcombine.high %v506, %v506
      %v767 = vunpack.c.l.s4 1983009808
      %v768 = vunpack.c.0.s8 %v767
      %v769 = vlaneseq
      %v770 = vshrl.u32 %v769, 7
      %v771 = vsub.s32 %v768, %v770
      %v772 = vrot.slane %v506, %v771
      %v774 = vunpack.c.l.s4 1983009808
      %v775 = vunpack.c.0.s8 %v774
      %v776 = vlaneseq
      %v777 = vshrl.u32 %v776, 7
      %v778 = vsub.s32 %v775, %v777
      %v779 = vrot.slane %v765, %v778
      %v780 = vcombine.high %v772, %v772
      %v781 = vcombine.high %v779, %v779
      %v783 = vunpack.c.l.s4 1983009808
      %v784 = vunpack.c.0.s8 %v783
      %v785 = vlaneseq
      %v786 = vshrl.u32 %v785, 7
      %v787 = vsub.s32 %v784, %v786
      %v788 = vrot.slane %v507, %v787
      %v789 = vcombine.high %v788, %v788
      %v790 = vcombine.high %v508, %v508
      %v792 = vunpack.c.l.s4 1983009808
      %v793 = vunpack.c.0.s8 %v792
      %v794 = vlaneseq
      %v795 = vshrl.u32 %v794, 7
      %v796 = vsub.s32 %v793, %v795
      %v797 = vrot.slane %v508, %v796
      %v799 = vunpack.c.l.s4 1983009808
      %v800 = vunpack.c.0.s8 %v799
      %v801 = vlaneseq
      %v802 = vshrl.u32 %v801, 7
      %v803 = vsub.s32 %v800, %v802
      %v804 = vrot.slane %v790, %v803
      %v805 = vcombine.high %v797, %v797
      %v806 = vcombine.high %v804, %v804
      %v808 = vunpack.c.l.s4 1983009808
      %v809 = vunpack.c.0.s8 %v808
      %v810 = vlaneseq
      %v811 = vshrl.u32 %v810, 7
      %v812 = vsub.s32 %v809, %v811
      %v813 = vrot.slane %v509, %v812
      %v814 = vcombine.high %v813, %v813
      %v815 = vcombine.high %v510, %v510
      %v817 = vunpack.c.l.s4 1983009808
      %v818 = vunpack.c.0.s8 %v817
      %v819 = vlaneseq
      %v820 = vshrl.u32 %v819, 7
      %v821 = vsub.s32 %v818, %v820
      %v822 = vrot.slane %v510, %v821
      %v824 = vunpack.c.l.s4 1983009808
      %v825 = vunpack.c.0.s8 %v824
      %v826 = vlaneseq
      %v827 = vshrl.u32 %v826, 7
      %v828 = vsub.s32 %v825, %v827
      %v829 = vrot.slane %v815, %v828
      %v830 = vcombine.high %v822, %v822
      %v831 = vcombine.high %v829, %v829
      %v833 = vunpack.c.l.s4 1983009808
      %v834 = vunpack.c.0.s8 %v833
      %v835 = vlaneseq
      %v836 = vshrl.u32 %v835, 7
      %v837 = vsub.s32 %v834, %v836
      %v838 = vrot.slane %v511, %v837
      %v839 = vcombine.high %v838, %v838
      %v840 = vcombine.high %v512, %v512
      %v842 = vunpack.c.l.s4 1983009808
      %v843 = vunpack.c.0.s8 %v842
      %v844 = vlaneseq
      %v845 = vshrl.u32 %v844, 7
      %v846 = vsub.s32 %v843, %v845
      %v847 = vrot.slane %v512, %v846
      %v849 = vunpack.c.l.s4 1983009808
      %v850 = vunpack.c.0.s8 %v849
      %v851 = vlaneseq
      %v852 = vshrl.u32 %v851, 7
      %v853 = vsub.s32 %v850, %v852
      %v854 = vrot.slane %v840, %v853
      %v855 = vcombine.high %v847, %v847
      %v856 = vcombine.high %v854, %v854
      %v858 = vunpack.c.l.s4 1983009808
      %v859 = vunpack.c.0.s8 %v858
      %v860 = vlaneseq
      %v861 = vshrl.u32 %v860, 7
      %v862 = vsub.s32 %v859, %v861
      %v863 = vrot.slane %v513, %v862
      %v864 = vcombine.high %v863, %v863
      %vm943 = vcmask 1041408
      %v944 = vsel %vm943, %v547, 0.0
      %v945 = vsel %vm943, %v572, 0.0
      %v946 = vadd.f32 %v944, %v945
      %v947 = vsel %vm943, %v597, 0.0
      %v948 = vadd.f32 %v946, %v947
      %v949 = vsel %vm943, %v622, 0.0
      %v950 = vadd.f32 %v948, %v949
      %v951 = vsel %vm943, %v647, 0.0
      %v952 = vadd.f32 %v950, %v951
      %v953 = vsel %vm943, %v672, 0.0
      %v954 = vadd.f32 %v952, %v953
      %v955 = vsel %vm943, %v697, 0.0
      %v956 = vadd.f32 %v954, %v955
      %v957 = vsel %vm943, %v722, 0.0
      %v958 = vadd.f32 %v956, %v957
      %v959 = vsel %vm943, %v747, 0.0
      %v960 = vadd.f32 %v958, %v959
      %v961 = vsel %vm943, %v772, 0.0
      %v962 = vadd.f32 %v960, %v961
      %v963 = vsel %vm943, %v797, 0.0
      %v964 = vadd.f32 %v962, %v963
      %v965 = vsel %vm943, %v822, 0.0
      %v966 = vadd.f32 %v964, %v965
      %v967 = vsel %vm943, %v847, 0.0
      %v968 = vadd.f32 %v966, %v967
      %v969 = vsel %vm943, %v555, 0.0
      %v970 = vsel %vm943, %v580, 0.0
      %v971 = vadd.f32 %v969, %v970
      %v972 = vsel %vm943, %v605, 0.0
      %v973 = vadd.f32 %v971, %v972
      %v974 = vsel %vm943, %v630, 0.0
      %v975 = vadd.f32 %v973, %v974
      %v976 = vsel %vm943, %v655, 0.0
      %v977 = vadd.f32 %v975, %v976
      %v978 = vsel %vm943, %v680, 0.0
      %v979 = vadd.f32 %v977, %v978
      %v980 = vsel %vm943, %v705, 0.0
      %v981 = vadd.f32 %v979, %v980
      %v982 = vsel %vm943, %v730, 0.0
      %v983 = vadd.f32 %v981, %v982
      %v984 = vsel %vm943, %v755, 0.0
      %v985 = vadd.f32 %v983, %v984
      %v986 = vsel %vm943, %v780, 0.0
      %v987 = vadd.f32 %v985, %v986
      %v988 = vsel %vm943, %v805, 0.0
      %v989 = vadd.f32 %v987, %v988
      %v990 = vsel %vm943, %v830, 0.0
      %v991 = vadd.f32 %v989, %v990
      %v992 = vsel %vm943, %v855, 0.0
      %v993 = vadd.f32 %v991, %v992
      %v994 = vsel %vm943, %v554, 0.0
      %v995 = vsel %vm943, %v579, 0.0
      %v996 = vadd.f32 %v994, %v995
      %v997 = vsel %vm943, %v604, 0.0
      %v998 = vadd.f32 %v996, %v997
      %v999 = vsel %vm943, %v629, 0.0
      %v1000 = vadd.f32 %v998, %v999
      %v1001 = vsel %vm943, %v654, 0.0
      %v1002 = vadd.f32 %v1000, %v1001
      %v1003 = vsel %vm943, %v679, 0.0
      %v1004 = vadd.f32 %v1002, %v1003
      %v1005 = vsel %vm943, %v704, 0.0
      %v1006 = vadd.f32 %v1004, %v1005
      %v1007 = vsel %vm943, %v729, 0.0
      %v1008 = vadd.f32 %v1006, %v1007
      %v1009 = vsel %vm943, %v754, 0.0
      %v1010 = vadd.f32 %v1008, %v1009
      %v1011 = vsel %vm943, %v779, 0.0
      %v1012 = vadd.f32 %v1010, %v1011
      %v1013 = vsel %vm943, %v804, 0.0
      %v1014 = vadd.f32 %v1012, %v1013
      %v1015 = vsel %vm943, %v829, 0.0
      %v1016 = vadd.f32 %v1014, %v1015
      %v1017 = vsel %vm943, %v854, 0.0
      %v1018 = vadd.f32 %v1016, %v1017
      %v1019 = vsel %vm943, %v556, 0.0
      %v1020 = vsel %vm943, %v581, 0.0
      %v1021 = vadd.f32 %v1019, %v1020
      %v1022 = vsel %vm943, %v606, 0.0
      %v1023 = vadd.f32 %v1021, %v1022
      %v1024 = vsel %vm943, %v631, 0.0
      %v1025 = vadd.f32 %v1023, %v1024
      %v1026 = vsel %vm943, %v656, 0.0
      %v1027 = vadd.f32 %v1025, %v1026
      %v1028 = vsel %vm943, %v681, 0.0
      %v1029 = vadd.f32 %v1027, %v1028
      %v1030 = vsel %vm943, %v706, 0.0
      %v1031 = vadd.f32 %v1029, %v1030
      %v1032 = vsel %vm943, %v731, 0.0
      %v1033 = vadd.f32 %v1031, %v1032
      %v1034 = vsel %vm943, %v756, 0.0
      %v1035 = vadd.f32 %v1033, %v1034
      %v1036 = vsel %vm943, %v781, 0.0
      %v1037 = vadd.f32 %v1035, %v1036
      %v1038 = vsel %vm943, %v806, 0.0
      %v1039 = vadd.f32 %v1037, %v1038
      %v1040 = vsel %vm943, %v831, 0.0
      %v1041 = vadd.f32 %v1039, %v1040
      %v1042 = vsel %vm943, %v856, 0.0
      %v1043 = vadd.f32 %v1041, %v1042
      %v1044 = vsel %vm943, %v563, 0.0
      %v1045 = vsel %vm943, %v588, 0.0
      %v1046 = vadd.f32 %v1044, %v1045
      %v1047 = vsel %vm943, %v613, 0.0
      %v1048 = vadd.f32 %v1046, %v1047
      %v1049 = vsel %vm943, %v638, 0.0
      %v1050 = vadd.f32 %v1048, %v1049
      %v1051 = vsel %vm943, %v663, 0.0
      %v1052 = vadd.f32 %v1050, %v1051
      %v1053 = vsel %vm943, %v688, 0.0
      %v1054 = vadd.f32 %v1052, %v1053
      %v1055 = vsel %vm943, %v713, 0.0
      %v1056 = vadd.f32 %v1054, %v1055
      %v1057 = vsel %vm943, %v738, 0.0
      %v1058 = vadd.f32 %v1056, %v1057
      %v1059 = vsel %vm943, %v763, 0.0
      %v1060 = vadd.f32 %v1058, %v1059
      %v1061 = vsel %vm943, %v788, 0.0
      %v1062 = vadd.f32 %v1060, %v1061
      %v1063 = vsel %vm943, %v813, 0.0
      %v1064 = vadd.f32 %v1062, %v1063
      %v1065 = vsel %vm943, %v838, 0.0
      %v1066 = vadd.f32 %v1064, %v1065
      %v1067 = vsel %vm943, %v863, 0.0
      %v1068 = vadd.f32 %v1066, %v1067
      %v1069 = vsel %vm943, %v564, 0.0
      %v1070 = vsel %vm943, %v589, 0.0
      %v1071 = vadd.f32 %v1069, %v1070
      %v1072 = vsel %vm943, %v614, 0.0
      %v1073 = vadd.f32 %v1071, %v1072
      %v1074 = vsel %vm943, %v639, 0.0
      %v1075 = vadd.f32 %v1073, %v1074
      %v1076 = vsel %vm943, %v664, 0.0
      %v1077 = vadd.f32 %v1075, %v1076
      %v1078 = vsel %vm943, %v689, 0.0
      %v1079 = vadd.f32 %v1077, %v1078
      %v1080 = vsel %vm943, %v714, 0.0
      %v1081 = vadd.f32 %v1079, %v1080
      %v1082 = vsel %vm943, %v739, 0.0
      %v1083 = vadd.f32 %v1081, %v1082
      %v1084 = vsel %vm943, %v764, 0.0
      %v1085 = vadd.f32 %v1083, %v1084
      %v1086 = vsel %vm943, %v789, 0.0
      %v1087 = vadd.f32 %v1085, %v1086
      %v1088 = vsel %vm943, %v814, 0.0
      %v1089 = vadd.f32 %v1087, %v1088
      %v1090 = vsel %vm943, %v839, 0.0
      %v1091 = vadd.f32 %v1089, %v1090
      %v1092 = vsel %vm943, %v864, 0.0
      %v1093 = vadd.f32 %v1091, %v1092
      %v1094 = vld [vmem:[#allocation8] sm:$0xff]
      %v1095 = vld [vmem:[#allocation8 + $0x8] sm:$0xff]
      %v1096 = vld [vmem:[#allocation8 + $0x10] sm:$0xff]
      %v1097 = vld [vmem:[#allocation8 + $0x18] sm:$0xff]
      %v1098 = vld [vmem:[#allocation8 + $0x20] sm:$0xff]
      %v1099 = vld [vmem:[#allocation8 + $0x28] sm:$0xff]
      %v1100 = vld [vmem:[#allocation8 + $0x30] sm:$0xff]
      %v1101 = vld [vmem:[#allocation8 + $0x38] sm:$0xff]
      %v1102 = vld [vmem:[#allocation8 + $0x40] sm:$0xff]
      %v1103 = vld [vmem:[#allocation8 + $0x48] sm:$0xff]
      %v1104 = vld [vmem:[#allocation8 + $0x50] sm:$0xff]
      %v1105 = vld [vmem:[#allocation8 + $0x58] sm:$0xff]
      %v1106 = vld [vmem:[#allocation8 + $0x60] sm:$0xff]
      %v1107 = vld [vmem:[#allocation8 + $0x68] sm:$0xff]
      %v1108 = vld [vmem:[#allocation8 + $0x70] sm:$0xff]
      %v1109 = vld [vmem:[#allocation8 + $0x78] sm:$0xff]
      %v1110 = vld [vmem:[#allocation8 + $0x80] sm:$0xff]
      %v1111 = vld [vmem:[#allocation8 + $0x88] sm:$0xff]
      %v1112 = vld [vmem:[#allocation8 + $0x90] sm:$0xff]
      %v1113 = vld [vmem:[#allocation8 + $0x98] sm:$0xff]
      %v1114 = vld [vmem:[#allocation8 + $0xa0] sm:$0xff]
      %v1115 = vld [vmem:[#allocation8 + $0xa8] sm:$0xff]
      %v1116 = vld [vmem:[#allocation8 + $0xb0] sm:$0xff]
      %v1117 = vld [vmem:[#allocation8 + $0xb8] sm:$0xff]
      %v1118 = vld [vmem:[#allocation8 + $0xc0] sm:$0xff]
      %v1119 = vld [vmem:[#allocation8 + $0xc8] sm:$0xff]
      %v1120 = vld [vmem:[#allocation8 + $0xd0] sm:$0xff]
      %v1121 = vld [vmem:[#allocation8 + $0xd8] sm:$0xff]
      %v1122 = vld [vmem:[#allocation8 + $0xe0] sm:$0xff]
      %v1123 = vld [vmem:[#allocation8 + $0xe8] sm:$0xff]
      %v1124 = vld [vmem:[#allocation8 + $0xf0] sm:$0xff]
      %v1125 = vld [vmem:[#allocation8 + $0xf8] sm:$0xff]
      %v1126 = vld [vmem:[#allocation8 + $0x100] sm:$0xff]
      %v1127 = vld [vmem:[#allocation8 + $0x108] sm:$0xff]
      %v1128 = vld [vmem:[#allocation8 + $0x110] sm:$0xff]
      %v1129 = vld [vmem:[#allocation8 + $0x118] sm:$0xff]
      %v1130 = vld [vmem:[#allocation8 + $0x120] sm:$0xff]
      %v1131 = vld [vmem:[#allocation8 + $0x128] sm:$0xff]
      %v1132 = vld [vmem:[#allocation8 + $0x130] sm:$0xff]
      %v1133 = vld [vmem:[#allocation8 + $0x138] sm:$0xff]
      %v1134 = vld [vmem:[#allocation8 + $0x140] sm:$0xff]
      %v1135 = vld [vmem:[#allocation8 + $0x148] sm:$0xff]
      %v1136 = vld [vmem:[#allocation8 + $0x150] sm:$0xff]
      %v1137 = vld [vmem:[#allocation8 + $0x158] sm:$0xff]
      %v1138 = vld [vmem:[#allocation8 + $0x160] sm:$0xff]
      %v1139 = vld [vmem:[#allocation8 + $0x168] sm:$0xff]
      %v1140 = vld [vmem:[#allocation8 + $0x170] sm:$0xff]
      %v1141 = vld [vmem:[#allocation8 + $0x178] sm:$0xff]
      %v1142 = vld [vmem:[#allocation8 + $0x180] sm:$0xff]
      %v1143 = vld [vmem:[#allocation8 + $0x188] sm:$0xff]
      %v1144 = vld [vmem:[#allocation8 + $0x190] sm:$0xff]
      %v1145 = vld [vmem:[#allocation8 + $0x198] sm:$0xff]
      %v1146 = vld [vmem:[#allocation8 + $0x1a0] sm:$0xff]
      %v1147 = vld [vmem:[#allocation8 + $0x1a8] sm:$0xff]
      %v1148 = vld [vmem:[#allocation8 + $0x1b0] sm:$0xff]
      %v1149 = vld [vmem:[#allocation8 + $0x1b8] sm:$0xff]
      %v1150 = vld [vmem:[#allocation8 + $0x1c0] sm:$0xff]
      %v1151 = vld [vmem:[#allocation8 + $0x1c8] sm:$0xff]
      %v1152 = vld [vmem:[#allocation8 + $0x1d0] sm:$0xff]
      %v1153 = vld [vmem:[#allocation8 + $0x1d8] sm:$0xff]
      %v1154 = vld [vmem:[#allocation8 + $0x1e0] sm:$0xff]
      %v1155 = vld [vmem:[#allocation8 + $0x1e8] sm:$0xff]
      %v1156 = vld [vmem:[#allocation8 + $0x1f0] sm:$0xff]
      %v1157 = vld [vmem:[#allocation8 + $0x1f8] sm:$0xff]
      %v1158 = vld [vmem:[#allocation8 + $0x200] sm:$0xff]
      %v1159 = vld [vmem:[#allocation8 + $0x208] sm:$0xff]
      %v1160 = vld [vmem:[#allocation8 + $0x210] sm:$0xff]
      %v1161 = vld [vmem:[#allocation8 + $0x218] sm:$0xff]
      %v1162 = vld [vmem:[#allocation8 + $0x220] sm:$0xff]
      %v1163 = vld [vmem:[#allocation8 + $0x228] sm:$0xff]
      %v1164 = vld [vmem:[#allocation8 + $0x230] sm:$0xff]
      %v1165 = vld [vmem:[#allocation8 + $0x238] sm:$0xff]
      %v1166 = vld [vmem:[#allocation8 + $0x240] sm:$0xff]
      %v1167 = vld [vmem:[#allocation8 + $0x248] sm:$0xff]
      %v1168 = vld [vmem:[#allocation8 + $0x250] sm:$0xff]
      %v1169 = vld [vmem:[#allocation8 + $0x258] sm:$0xff]
      %v1170 = vld [vmem:[#allocation8 + $0x260] sm:$0xff]
      %v1171 = vld [vmem:[#allocation8 + $0x268] sm:$0xff]
      %v1172 = vld [vmem:[#allocation8 + $0x270] sm:$0xff]
      %v1173 = vld [vmem:[#allocation8 + $0x278] sm:$0xff]
      %v1174 = vld [vmem:[#allocation8 + $0x280] sm:$0xff]
      %v1175 = vld [vmem:[#allocation8 + $0x288] sm:$0xff]
      %v1176 = vld [vmem:[#allocation8 + $0x290] sm:$0xff]
      %v1177 = vld [vmem:[#allocation8 + $0x298] sm:$0xff]
      %v1178 = vld [vmem:[#allocation8 + $0x2a0] sm:$0xff]
      %v1179 = vld [vmem:[#allocation8 + $0x2a8] sm:$0xff]
      %v1180 = vld [vmem:[#allocation8 + $0x2b0] sm:$0xff]
      %v1181 = vld [vmem:[#allocation8 + $0x2b8] sm:$0xff]
      %v1182 = vld [vmem:[#allocation8 + $0x2c0] sm:$0xff]
      %v1183 = vld [vmem:[#allocation8 + $0x2c8] sm:$0xff]
      %v1184 = vld [vmem:[#allocation8 + $0x2d0] sm:$0xff]
      %v1185 = vld [vmem:[#allocation8 + $0x2d8] sm:$0xff]
      %v1186 = vld [vmem:[#allocation8 + $0x2e0] sm:$0xff]
      %v1187 = vld [vmem:[#allocation8 + $0x2e8] sm:$0xff]
      %v1188 = vld [vmem:[#allocation8 + $0x2f0] sm:$0xff]
      %v1189 = vld [vmem:[#allocation8 + $0x2f8] sm:$0xff]
      %v1190 = vld [vmem:[#allocation9] sm:$0xff]
      %v1191 = vld [vmem:[#allocation9 + $0x8] sm:$0xff]
      %v1192 = vld [vmem:[#allocation9 + $0x10] sm:$0xff]
      %v1193 = vld [vmem:[#allocation9 + $0x18] sm:$0xff]
      %v1194 = vld [vmem:[#allocation9 + $0x20] sm:$0xff]
      %v1195 = vld [vmem:[#allocation9 + $0x28] sm:$0xff]
      %v1196 = vld [vmem:[#allocation9 + $0x30] sm:$0xff]
      %v1197 = vld [vmem:[#allocation9 + $0x38] sm:$0xff]
      %v1198 = vld [vmem:[#allocation9 + $0x40] sm:$0xff]
      %v1199 = vld [vmem:[#allocation9 + $0x48] sm:$0xff]
      %v1200 = vld [vmem:[#allocation9 + $0x50] sm:$0xff]
      %v1201 = vld [vmem:[#allocation9 + $0x58] sm:$0xff]
      %v1202 = vld [vmem:[#allocation9 + $0x60] sm:$0xff]
      %v1203 = vld [vmem:[#allocation9 + $0x68] sm:$0xff]
      %v1204 = vld [vmem:[#allocation9 + $0x70] sm:$0xff]
      %v1205 = vld [vmem:[#allocation9 + $0x78] sm:$0xff]
      %v1206 = vld [vmem:[#allocation9 + $0x80] sm:$0xff]
      %v1207 = vld [vmem:[#allocation9 + $0x88] sm:$0xff]
      %v1208 = vld [vmem:[#allocation9 + $0x90] sm:$0xff]
      %v1209 = vld [vmem:[#allocation9 + $0x98] sm:$0xff]
      %v1210 = vld [vmem:[#allocation9 + $0xa0] sm:$0xff]
      %v1211 = vld [vmem:[#allocation9 + $0xa8] sm:$0xff]
      %v1212 = vld [vmem:[#allocation9 + $0xb0] sm:$0xff]
      %v1213 = vld [vmem:[#allocation9 + $0xb8] sm:$0xff]
      %v1214 = vld [vmem:[#allocation9 + $0xc0] sm:$0xff]
      %v1215 = vld [vmem:[#allocation9 + $0xc8] sm:$0xff]
      %v1216 = vld [vmem:[#allocation9 + $0xd0] sm:$0xff]
      %v1217 = vld [vmem:[#allocation9 + $0xd8] sm:$0xff]
      %v1218 = vld [vmem:[#allocation9 + $0xe0] sm:$0xff]
      %v1219 = vld [vmem:[#allocation9 + $0xe8] sm:$0xff]
      %v1220 = vld [vmem:[#allocation9 + $0xf0] sm:$0xff]
      %v1221 = vld [vmem:[#allocation9 + $0xf8] sm:$0xff]
      %v1222 = vld [vmem:[#allocation9 + $0x100] sm:$0xff]
      %v1223 = vld [vmem:[#allocation9 + $0x108] sm:$0xff]
      %v1224 = vld [vmem:[#allocation9 + $0x110] sm:$0xff]
      %v1225 = vld [vmem:[#allocation9 + $0x118] sm:$0xff]
      %v1226 = vld [vmem:[#allocation9 + $0x120] sm:$0xff]
      %v1227 = vld [vmem:[#allocation9 + $0x128] sm:$0xff]
      %v1228 = vld [vmem:[#allocation9 + $0x130] sm:$0xff]
      %v1229 = vld [vmem:[#allocation9 + $0x138] sm:$0xff]
      %v1230 = vld [vmem:[#allocation9 + $0x140] sm:$0xff]
      %v1231 = vld [vmem:[#allocation9 + $0x148] sm:$0xff]
      %v1232 = vld [vmem:[#allocation9 + $0x150] sm:$0xff]
      %v1233 = vld [vmem:[#allocation9 + $0x158] sm:$0xff]
      %v1234 = vld [vmem:[#allocation9 + $0x160] sm:$0xff]
      %v1235 = vld [vmem:[#allocation9 + $0x168] sm:$0xff]
      %v1236 = vld [vmem:[#allocation9 + $0x170] sm:$0xff]
      %v1237 = vld [vmem:[#allocation9 + $0x178] sm:$0xff]
      %v1238 = vld [vmem:[#allocation9 + $0x180] sm:$0xff]
      %v1239 = vld [vmem:[#allocation9 + $0x188] sm:$0xff]
      %v1240 = vld [vmem:[#allocation9 + $0x190] sm:$0xff]
      %v1241 = vld [vmem:[#allocation9 + $0x198] sm:$0xff]
      %v1242 = vld [vmem:[#allocation9 + $0x1a0] sm:$0xff]
      %v1243 = vld [vmem:[#allocation9 + $0x1a8] sm:$0xff]
      %v1244 = vld [vmem:[#allocation9 + $0x1b0] sm:$0xff]
      %v1245 = vld [vmem:[#allocation9 + $0x1b8] sm:$0xff]
      %v1246 = vld [vmem:[#allocation9 + $0x1c0] sm:$0xff]
      %v1247 = vld [vmem:[#allocation9 + $0x1c8] sm:$0xff]
      %v1248 = vld [vmem:[#allocation9 + $0x1d0] sm:$0xff]
      %v1249 = vld [vmem:[#allocation9 + $0x1d8] sm:$0xff]
      %v1250 = vld [vmem:[#allocation9 + $0x1e0] sm:$0xff]
      %v1251 = vld [vmem:[#allocation9 + $0x1e8] sm:$0xff]
      %v1252 = vld [vmem:[#allocation9 + $0x1f0] sm:$0xff]
      %v1253 = vld [vmem:[#allocation9 + $0x1f8] sm:$0xff]
      %v1254 = vld [vmem:[#allocation9 + $0x200] sm:$0xff]
      %v1255 = vld [vmem:[#allocation9 + $0x208] sm:$0xff]
      %v1256 = vld [vmem:[#allocation9 + $0x210] sm:$0xff]
      %v1257 = vld [vmem:[#allocation9 + $0x218] sm:$0xff]
      %v1258 = vld [vmem:[#allocation9 + $0x220] sm:$0xff]
      %v1259 = vld [vmem:[#allocation9 + $0x228] sm:$0xff]
      %v1260 = vld [vmem:[#allocation9 + $0x230] sm:$0xff]
      %v1261 = vld [vmem:[#allocation9 + $0x238] sm:$0xff]
      %v1262 = vld [vmem:[#allocation9 + $0x240] sm:$0xff]
      %v1263 = vld [vmem:[#allocation9 + $0x248] sm:$0xff]
      %v1264 = vld [vmem:[#allocation9 + $0x250] sm:$0xff]
      %v1265 = vld [vmem:[#allocation9 + $0x258] sm:$0xff]
      %v1266 = vld [vmem:[#allocation9 + $0x260] sm:$0xff]
      %v1267 = vld [vmem:[#allocation9 + $0x268] sm:$0xff]
      %v1268 = vld [vmem:[#allocation9 + $0x270] sm:$0xff]
      %v1269 = vld [vmem:[#allocation9 + $0x278] sm:$0xff]
      %v1270 = vld [vmem:[#allocation9 + $0x280] sm:$0xff]
      %v1271 = vld [vmem:[#allocation9 + $0x288] sm:$0xff]
      %v1272 = vld [vmem:[#allocation9 + $0x290] sm:$0xff]
      %v1273 = vld [vmem:[#allocation9 + $0x298] sm:$0xff]
      %v1274 = vld [vmem:[#allocation9 + $0x2a0] sm:$0xff]
      %v1275 = vld [vmem:[#allocation9 + $0x2a8] sm:$0xff]
      %v1276 = vld [vmem:[#allocation9 + $0x2b0] sm:$0xff]
      %v1277 = vld [vmem:[#allocation9 + $0x2b8] sm:$0xff]
      %v1278 = vld [vmem:[#allocation9 + $0x2c0] sm:$0xff]
      %v1279 = vld [vmem:[#allocation9 + $0x2c8] sm:$0xff]
      %v1280 = vld [vmem:[#allocation9 + $0x2d0] sm:$0xff]
      %v1281 = vld [vmem:[#allocation9 + $0x2d8] sm:$0xff]
      %v1282 = vld [vmem:[#allocation9 + $0x2e0] sm:$0xff]
      %v1283 = vld [vmem:[#allocation9 + $0x2e8] sm:$0xff]
      %v1284 = vld [vmem:[#allocation9 + $0x2f0] sm:$0xff]
      %v1285 = vld [vmem:[#allocation9 + $0x2f8] sm:$0xff]
      %v1288 = vcombine.high %v264, %v264
      %v1290 = vunpack.c.l.s4 1983009808
      %v1291 = vunpack.c.0.s8 %v1290
      %v1292 = vlaneseq
      %v1293 = vshrl.u32 %v1292, 7
      %v1294 = vsub.s32 %v1291, %v1293
      %v1295 = vrot.slane %v264, %v1294
      %v1297 = vunpack.c.l.s4 1983009808
      %v1298 = vunpack.c.0.s8 %v1297
      %v1299 = vlaneseq
      %v1300 = vshrl.u32 %v1299, 7
      %v1301 = vsub.s32 %v1298, %v1300
      %v1302 = vrot.slane %v1288, %v1301
      %v1303 = vcombine.high %v1295, %v1295
      %v1304 = vcombine.high %v1302, %v1302
      %v1306 = vunpack.c.l.s4 1983009808
      %v1307 = vunpack.c.0.s8 %v1306
      %v1308 = vlaneseq
      %v1309 = vshrl.u32 %v1308, 7
      %v1310 = vsub.s32 %v1307, %v1309
      %v1311 = vrot.slane %v265, %v1310
      %v1312 = vcombine.high %v1311, %v1311
      %1319 = vmatprep.subr.mxu0 0.0
      %1320 = vmatpush1.msra.mxu0 %v1205
      %1321 = vmatprep.subr.mxu0 0.0
      %1322 = vmatpush1.msra.mxu0 %v1204
      %1323 = vmatprep.subr.mxu0 0.0
      %1324 = vmatpush1.msra.mxu0 %v1203
      %1325 = vmatprep.subr.mxu0 0.0
      %1326 = vmatpush1.msra.mxu0 %v1202
      %1327 = vmatprep.subr.mxu0 0.0
      %1328 = vmatpush1.msra.mxu0 %v1201
      %1329 = vmatprep.subr.mxu0 0.0
      %1330 = vmatpush1.msra.mxu0 %v1200
      %1331 = vmatprep.subr.mxu0 0.0
      %1332 = vmatpush1.msra.mxu0 %v1199
      %1333 = vmatprep.subr.mxu0 0.0
      %1334 = vmatpush1.msra.mxu0 %v1198
      %1335 = vmatprep.subr.mxu0 0.0
      %1336 = vmatpush1.msra.mxu0 %v1197
      %1337 = vmatprep.subr.mxu0 0.0
      %1338 = vmatpush1.msra.mxu0 %v1196
      %1339 = vmatprep.subr.mxu0 0.0
      %1340 = vmatpush1.msra.mxu0 %v1195
      %1341 = vmatprep.subr.mxu0 0.0
      %1342 = vmatpush1.msra.mxu0 %v1194
      %1343 = vmatprep.subr.mxu0 0.0
      %1344 = vmatpush1.msra.mxu0 %v1193
      %1345 = vmatprep.subr.mxu0 0.0
      %1346 = vmatpush1.msra.mxu0 %v1192
      %1347 = vmatprep.subr.mxu0 0.0
      %1348 = vmatpush1.msra.mxu0 %v1191
      %1349 = vmatprep.subr.mxu0 0.0
      %1350 = vmatpush1.msra.mxu0 %v1190
      %1351 = vmatprep.subr.mxu0 0.0
      %1352 = vmatpush2.msra.mxu0 %v1221
      %1353 = vmatprep.subr.mxu0 0.0
      %1354 = vmatpush2.msra.mxu0 %v1220
      %1355 = vmatprep.subr.mxu0 0.0
      %1356 = vmatpush2.msra.mxu0 %v1219
      %1357 = vmatprep.subr.mxu0 0.0
      %1358 = vmatpush2.msra.mxu0 %v1218
      %1359 = vmatprep.subr.mxu0 0.0
      %1360 = vmatpush2.msra.mxu0 %v1217
      %1361 = vmatprep.subr.mxu0 0.0
      %1362 = vmatpush2.msra.mxu0 %v1216
      %1363 = vmatprep.subr.mxu0 0.0
      %1364 = vmatpush2.msra.mxu0 %v1215
      %1365 = vmatprep.subr.mxu0 0.0
      %1366 = vmatpush2.msra.mxu0 %v1214
      %1367 = vmatprep.subr.mxu0 0.0
      %1368 = vmatpush2.msra.mxu0 %v1213
      %1369 = vmatprep.subr.mxu0 0.0
      %1370 = vmatpush2.msra.mxu0 %v1212
      %1371 = vmatprep.subr.mxu0 0.0
      %1372 = vmatpush2.msra.mxu0 %v1211
      %1373 = vmatprep.subr.mxu0 0.0
      %1374 = vmatpush2.msra.mxu0 %v1210
      %1375 = vmatprep.subr.mxu0 0.0
      %1376 = vmatpush2.msra.mxu0 %v1209
      %1377 = vmatprep.subr.mxu0 0.0
      %1378 = vmatpush2.msra.mxu0 %v1208
      %1379 = vmatprep.subr.mxu0 0.0
      %1380 = vmatpush2.msra.mxu0 %v1207
      %1381 = vmatprep.subr.mxu0 0.0
      %1382 = vmatpush2.msra.mxu0 %v1206
      %1383 = vmatprep.mubr.f32.mxu0 %v1303
      %1384 = vmatmul.mubr.f32.gmra.mxu0 %v1295
      %v1385 = vpop.f32.mrf.mxu0
      %v1386 = vadd.f32 0.0, %v1385
      %v1387 = vpop.f32.mrf.mxu0
      %1388 = vdwg.mxu0
      %1389 = vmatprep.subr.mxu0 0.0
      %1390 = vmatpush1.msra.mxu0 %v1237
      %1391 = vmatprep.subr.mxu0 0.0
      %1392 = vmatpush1.msra.mxu0 %v1236
      %1393 = vmatprep.subr.mxu0 0.0
      %1394 = vmatpush1.msra.mxu0 %v1235
      %1395 = vmatprep.subr.mxu0 0.0
      %1396 = vmatpush1.msra.mxu0 %v1234
      %1397 = vmatprep.subr.mxu0 0.0
      %1398 = vmatpush1.msra.mxu0 %v1233
      %1399 = vmatprep.subr.mxu0 0.0
      %1400 = vmatpush1.msra.mxu0 %v1232
      %1401 = vmatprep.subr.mxu0 0.0
      %1402 = vmatpush1.msra.mxu0 %v1231
      %1403 = vmatprep.subr.mxu0 0.0
      %1404 = vmatpush1.msra.mxu0 %v1230
      %1405 = vmatprep.subr.mxu0 0.0
      %1406 = vmatpush1.msra.mxu0 %v1229
      %1407 = vmatprep.subr.mxu0 0.0
      %1408 = vmatpush1.msra.mxu0 %v1228
      %1409 = vmatprep.subr.mxu0 0.0
      %1410 = vmatpush1.msra.mxu0 %v1227
      %1411 = vmatprep.subr.mxu0 0.0
      %1412 = vmatpush1.msra.mxu0 %v1226
      %1413 = vmatprep.subr.mxu0 0.0
      %1414 = vmatpush1.msra.mxu0 %v1225
      %1415 = vmatprep.subr.mxu0 0.0
      %1416 = vmatpush1.msra.mxu0 %v1224
      %1417 = vmatprep.subr.mxu0 0.0
      %1418 = vmatpush1.msra.mxu0 %v1223
      %1419 = vmatprep.subr.mxu0 0.0
      %1420 = vmatpush1.msra.mxu0 %v1222
      %1421 = vmatprep.subr.mxu0 0.0
      %1422 = vmatpush2.msra.mxu0 %v1253
      %1423 = vmatprep.subr.mxu0 0.0
      %1424 = vmatpush2.msra.mxu0 %v1252
      %1425 = vmatprep.subr.mxu0 0.0
      %1426 = vmatpush2.msra.mxu0 %v1251
      %1427 = vmatprep.subr.mxu0 0.0
      %1428 = vmatpush2.msra.mxu0 %v1250
      %1429 = vmatprep.subr.mxu0 0.0
      %1430 = vmatpush2.msra.mxu0 %v1249
      %1431 = vmatprep.subr.mxu0 0.0
      %1432 = vmatpush2.msra.mxu0 %v1248
      %1433 = vmatprep.subr.mxu0 0.0
      %1434 = vmatpush2.msra.mxu0 %v1247
      %1435 = vmatprep.subr.mxu0 0.0
      %1436 = vmatpush2.msra.mxu0 %v1246
      %1437 = vmatprep.subr.mxu0 0.0
      %1438 = vmatpush2.msra.mxu0 %v1245
      %1439 = vmatprep.subr.mxu0 0.0
      %1440 = vmatpush2.msra.mxu0 %v1244
      %1441 = vmatprep.subr.mxu0 0.0
      %1442 = vmatpush2.msra.mxu0 %v1243
      %1443 = vmatprep.subr.mxu0 0.0
      %1444 = vmatpush2.msra.mxu0 %v1242
      %1445 = vmatprep.subr.mxu0 0.0
      %1446 = vmatpush2.msra.mxu0 %v1241
      %1447 = vmatprep.subr.mxu0 0.0
      %1448 = vmatpush2.msra.mxu0 %v1240
      %1449 = vmatprep.subr.mxu0 0.0
      %1450 = vmatpush2.msra.mxu0 %v1239
      %1451 = vmatprep.subr.mxu0 0.0
      %1452 = vmatpush2.msra.mxu0 %v1238
      %1453 = vmatprep.mubr.f32.mxu0 %v1304
      %1454 = vmatmul.mubr.f32.gmra.mxu0 %v1302
      %v1455 = vpop.f32.mrf.mxu0
      %v1456 = vadd.f32 %v1386, %v1455
      %v1457 = vpop.f32.mrf.mxu0
      %1458 = vdwg.mxu0
      %1459 = vmatprep.subr.mxu0 0.0
      %1460 = vmatpush1.msra.mxu0 %v1269
      %1461 = vmatprep.subr.mxu0 0.0
      %1462 = vmatpush1.msra.mxu0 %v1268
      %1463 = vmatprep.subr.mxu0 0.0
      %1464 = vmatpush1.msra.mxu0 %v1267
      %1465 = vmatprep.subr.mxu0 0.0
      %1466 = vmatpush1.msra.mxu0 %v1266
      %1467 = vmatprep.subr.mxu0 0.0
      %1468 = vmatpush1.msra.mxu0 %v1265
      %1469 = vmatprep.subr.mxu0 0.0
      %1470 = vmatpush1.msra.mxu0 %v1264
      %1471 = vmatprep.subr.mxu0 0.0
      %1472 = vmatpush1.msra.mxu0 %v1263
      %1473 = vmatprep.subr.mxu0 0.0
      %1474 = vmatpush1.msra.mxu0 %v1262
      %1475 = vmatprep.subr.mxu0 0.0
      %1476 = vmatpush1.msra.mxu0 %v1261
      %1477 = vmatprep.subr.mxu0 0.0
      %1478 = vmatpush1.msra.mxu0 %v1260
      %1479 = vmatprep.subr.mxu0 0.0
      %1480 = vmatpush1.msra.mxu0 %v1259
      %1481 = vmatprep.subr.mxu0 0.0
      %1482 = vmatpush1.msra.mxu0 %v1258
      %1483 = vmatprep.subr.mxu0 0.0
      %1484 = vmatpush1.msra.mxu0 %v1257
      %1485 = vmatprep.subr.mxu0 0.0
      %1486 = vmatpush1.msra.mxu0 %v1256
      %1487 = vmatprep.subr.mxu0 0.0
      %1488 = vmatpush1.msra.mxu0 %v1255
      %1489 = vmatprep.subr.mxu0 0.0
      %1490 = vmatpush1.msra.mxu0 %v1254
      %1491 = vmatprep.subr.mxu0 0.0
      %1492 = vmatpush2.msra.mxu0 %v1285
      %1493 = vmatprep.subr.mxu0 0.0
      %1494 = vmatpush2.msra.mxu0 %v1284
      %1495 = vmatprep.subr.mxu0 0.0
      %1496 = vmatpush2.msra.mxu0 %v1283
      %1497 = vmatprep.subr.mxu0 0.0
      %1498 = vmatpush2.msra.mxu0 %v1282
      %1499 = vmatprep.subr.mxu0 0.0
      %1500 = vmatpush2.msra.mxu0 %v1281
      %1501 = vmatprep.subr.mxu0 0.0
      %1502 = vmatpush2.msra.mxu0 %v1280
      %1503 = vmatprep.subr.mxu0 0.0
      %1504 = vmatpush2.msra.mxu0 %v1279
      %1505 = vmatprep.subr.mxu0 0.0
      %1506 = vmatpush2.msra.mxu0 %v1278
      %1507 = vmatprep.subr.mxu0 0.0
      %1508 = vmatpush2.msra.mxu0 %v1277
      %1509 = vmatprep.subr.mxu0 0.0
      %1510 = vmatpush2.msra.mxu0 %v1276
      %1511 = vmatprep.subr.mxu0 0.0
      %1512 = vmatpush2.msra.mxu0 %v1275
      %1513 = vmatprep.subr.mxu0 0.0
      %1514 = vmatpush2.msra.mxu0 %v1274
      %1515 = vmatprep.subr.mxu0 0.0
      %1516 = vmatpush2.msra.mxu0 %v1273
      %1517 = vmatprep.subr.mxu0 0.0
      %1518 = vmatpush2.msra.mxu0 %v1272
      %1519 = vmatprep.subr.mxu0 0.0
      %1520 = vmatpush2.msra.mxu0 %v1271
      %1521 = vmatprep.subr.mxu0 0.0
      %1522 = vmatpush2.msra.mxu0 %v1270
      %1523 = vmatprep.mubr.f32.mxu0 %v1312
      %1524 = vmatmul.mubr.f32.gmra.mxu0 %v1311
      %v1525 = vpop.f32.mrf.mxu0
      %v1526 = vadd.f32 %v1456, %v1525
      %v1527 = vpop.f32.mrf.mxu0
      %1528 = vdwg.mxu0
      %1529 = vmatprep.subr.mxu0 0.0
      %1530 = vmatpush1.msra.mxu0 %v1109
      %1531 = vmatprep.subr.mxu0 0.0
      %1532 = vmatpush1.msra.mxu0 %v1108
      %1533 = vmatprep.subr.mxu0 0.0
      %1534 = vmatpush1.msra.mxu0 %v1107
      %1535 = vmatprep.subr.mxu0 0.0
      %1536 = vmatpush1.msra.mxu0 %v1106
      %1537 = vmatprep.subr.mxu0 0.0
      %1538 = vmatpush1.msra.mxu0 %v1105
      %1539 = vmatprep.subr.mxu0 0.0
      %1540 = vmatpush1.msra.mxu0 %v1104
      %1541 = vmatprep.subr.mxu0 0.0
      %1542 = vmatpush1.msra.mxu0 %v1103
      %1543 = vmatprep.subr.mxu0 0.0
      %1544 = vmatpush1.msra.mxu0 %v1102
      %1545 = vmatprep.subr.mxu0 0.0
      %1546 = vmatpush1.msra.mxu0 %v1101
      %1547 = vmatprep.subr.mxu0 0.0
      %1548 = vmatpush1.msra.mxu0 %v1100
      %1549 = vmatprep.subr.mxu0 0.0
      %1550 = vmatpush1.msra.mxu0 %v1099
      %1551 = vmatprep.subr.mxu0 0.0
      %1552 = vmatpush1.msra.mxu0 %v1098
      %1553 = vmatprep.subr.mxu0 0.0
      %1554 = vmatpush1.msra.mxu0 %v1097
      %1555 = vmatprep.subr.mxu0 0.0
      %1556 = vmatpush1.msra.mxu0 %v1096
      %1557 = vmatprep.subr.mxu0 0.0
      %1558 = vmatpush1.msra.mxu0 %v1095
      %1559 = vmatprep.subr.mxu0 0.0
      %1560 = vmatpush1.msra.mxu0 %v1094
      %1561 = vmatprep.subr.mxu0 0.0
      %1562 = vmatpush2.msra.mxu0 %v1125
      %1563 = vmatprep.subr.mxu0 0.0
      %1564 = vmatpush2.msra.mxu0 %v1124
      %1565 = vmatprep.subr.mxu0 0.0
      %1566 = vmatpush2.msra.mxu0 %v1123
      %1567 = vmatprep.subr.mxu0 0.0
      %1568 = vmatpush2.msra.mxu0 %v1122
      %1569 = vmatprep.subr.mxu0 0.0
      %1570 = vmatpush2.msra.mxu0 %v1121
      %1571 = vmatprep.subr.mxu0 0.0
      %1572 = vmatpush2.msra.mxu0 %v1120
      %1573 = vmatprep.subr.mxu0 0.0
      %1574 = vmatpush2.msra.mxu0 %v1119
      %1575 = vmatprep.subr.mxu0 0.0
      %1576 = vmatpush2.msra.mxu0 %v1118
      %1577 = vmatprep.subr.mxu0 0.0
      %1578 = vmatpush2.msra.mxu0 %v1117
      %1579 = vmatprep.subr.mxu0 0.0
      %1580 = vmatpush2.msra.mxu0 %v1116
      %1581 = vmatprep.subr.mxu0 0.0
      %1582 = vmatpush2.msra.mxu0 %v1115
      %1583 = vmatprep.subr.mxu0 0.0
      %1584 = vmatpush2.msra.mxu0 %v1114
      %1585 = vmatprep.subr.mxu0 0.0
      %1586 = vmatpush2.msra.mxu0 %v1113
      %1587 = vmatprep.subr.mxu0 0.0
      %1588 = vmatpush2.msra.mxu0 %v1112
      %1589 = vmatprep.subr.mxu0 0.0
      %1590 = vmatpush2.msra.mxu0 %v1111
      %1591 = vmatprep.subr.mxu0 0.0
      %1592 = vmatpush2.msra.mxu0 %v1110
      %1593 = vmatprep.mubr.f32.mxu0 %v993
      %1594 = vmatmul.mubr.f32.gmra.mxu0 %v968
      %v1595 = vpop.f32.mrf.mxu0
      %v1596 = vadd.f32 %v1526, %v1595
      %v1597 = vpop.f32.mrf.mxu0
      %1598 = vdwg.mxu0
      %1599 = vmatprep.subr.mxu0 0.0
      %1600 = vmatpush1.msra.mxu0 %v1141
      %1601 = vmatprep.subr.mxu0 0.0
      %1602 = vmatpush1.msra.mxu0 %v1140
      %1603 = vmatprep.subr.mxu0 0.0
      %1604 = vmatpush1.msra.mxu0 %v1139
      %1605 = vmatprep.subr.mxu0 0.0
      %1606 = vmatpush1.msra.mxu0 %v1138
      %1607 = vmatprep.subr.mxu0 0.0
      %1608 = vmatpush1.msra.mxu0 %v1137
      %1609 = vmatprep.subr.mxu0 0.0
      %1610 = vmatpush1.msra.mxu0 %v1136
      %1611 = vmatprep.subr.mxu0 0.0
      %1612 = vmatpush1.msra.mxu0 %v1135
      %1613 = vmatprep.subr.mxu0 0.0
      %1614 = vmatpush1.msra.mxu0 %v1134
      %1615 = vmatprep.subr.mxu0 0.0
      %1616 = vmatpush1.msra.mxu0 %v1133
      %1617 = vmatprep.subr.mxu0 0.0
      %1618 = vmatpush1.msra.mxu0 %v1132
      %1619 = vmatprep.subr.mxu0 0.0
      %1620 = vmatpush1.msra.mxu0 %v1131
      %1621 = vmatprep.subr.mxu0 0.0
      %1622 = vmatpush1.msra.mxu0 %v1130
      %1623 = vmatprep.subr.mxu0 0.0
      %1624 = vmatpush1.msra.mxu0 %v1129
      %1625 = vmatprep.subr.mxu0 0.0
      %1626 = vmatpush1.msra.mxu0 %v1128
      %1627 = vmatprep.subr.mxu0 0.0
      %1628 = vmatpush1.msra.mxu0 %v1127
      %1629 = vmatprep.subr.mxu0 0.0
      %1630 = vmatpush1.msra.mxu0 %v1126
      %1631 = vmatprep.subr.mxu0 0.0
      %1632 = vmatpush2.msra.mxu0 %v1157
      %1633 = vmatprep.subr.mxu0 0.0
      %1634 = vmatpush2.msra.mxu0 %v1156
      %1635 = vmatprep.subr.mxu0 0.0
      %1636 = vmatpush2.msra.mxu0 %v1155
      %1637 = vmatprep.subr.mxu0 0.0
      %1638 = vmatpush2.msra.mxu0 %v1154
      %1639 = vmatprep.subr.mxu0 0.0
      %1640 = vmatpush2.msra.mxu0 %v1153
      %1641 = vmatprep.subr.mxu0 0.0
      %1642 = vmatpush2.msra.mxu0 %v1152
      %1643 = vmatprep.subr.mxu0 0.0
      %1644 = vmatpush2.msra.mxu0 %v1151
      %1645 = vmatprep.subr.mxu0 0.0
      %1646 = vmatpush2.msra.mxu0 %v1150
      %1647 = vmatprep.subr.mxu0 0.0
      %1648 = vmatpush2.msra.mxu0 %v1149
      %1649 = vmatprep.subr.mxu0 0.0
      %1650 = vmatpush2.msra.mxu0 %v1148
      %1651 = vmatprep.subr.mxu0 0.0
      %1652 = vmatpush2.msra.mxu0 %v1147
      %1653 = vmatprep.subr.mxu0 0.0
      %1654 = vmatpush2.msra.mxu0 %v1146
      %1655 = vmatprep.subr.mxu0 0.0
      %1656 = vmatpush2.msra.mxu0 %v1145
      %1657 = vmatprep.subr.mxu0 0.0
      %1658 = vmatpush2.msra.mxu0 %v1144
      %1659 = vmatprep.subr.mxu0 0.0
      %1660 = vmatpush2.msra.mxu0 %v1143
      %1661 = vmatprep.subr.mxu0 0.0
      %1662 = vmatpush2.msra.mxu0 %v1142
      %1663 = vmatprep.mubr.f32.mxu0 %v1043
      %1664 = vmatmul.mubr.f32.gmra.mxu0 %v1018
      %v1665 = vpop.f32.mrf.mxu0
      %v1666 = vadd.f32 %v1596, %v1665
      %v1667 = vpop.f32.mrf.mxu0
      %1668 = vdwg.mxu0
      %1669 = vmatprep.subr.mxu0 0.0
      %1670 = vmatpush1.msra.mxu0 %v1173
      %1671 = vmatprep.subr.mxu0 0.0
      %1672 = vmatpush1.msra.mxu0 %v1172
      %1673 = vmatprep.subr.mxu0 0.0
      %1674 = vmatpush1.msra.mxu0 %v1171
      %1675 = vmatprep.subr.mxu0 0.0
      %1676 = vmatpush1.msra.mxu0 %v1170
      %1677 = vmatprep.subr.mxu0 0.0
      %1678 = vmatpush1.msra.mxu0 %v1169
      %1679 = vmatprep.subr.mxu0 0.0
      %1680 = vmatpush1.msra.mxu0 %v1168
      %1681 = vmatprep.subr.mxu0 0.0
      %1682 = vmatpush1.msra.mxu0 %v1167
      %1683 = vmatprep.subr.mxu0 0.0
      %1684 = vmatpush1.msra.mxu0 %v1166
      %1685 = vmatprep.subr.mxu0 0.0
      %1686 = vmatpush1.msra.mxu0 %v1165
      %1687 = vmatprep.subr.mxu0 0.0
      %1688 = vmatpush1.msra.mxu0 %v1164
      %1689 = vmatprep.subr.mxu0 0.0
      %1690 = vmatpush1.msra.mxu0 %v1163
      %1691 = vmatprep.subr.mxu0 0.0
      %1692 = vmatpush1.msra.mxu0 %v1162
      %1693 = vmatprep.subr.mxu0 0.0
      %1694 = vmatpush1.msra.mxu0 %v1161
      %1695 = vmatprep.subr.mxu0 0.0
      %1696 = vmatpush1.msra.mxu0 %v1160
      %1697 = vmatprep.subr.mxu0 0.0
      %1698 = vmatpush1.msra.mxu0 %v1159
      %1699 = vmatprep.subr.mxu0 0.0
      %1700 = vmatpush1.msra.mxu0 %v1158
      %1701 = vmatprep.subr.mxu0 0.0
      %1702 = vmatpush2.msra.mxu0 %v1189
      %1703 = vmatprep.subr.mxu0 0.0
      %1704 = vmatpush2.msra.mxu0 %v1188
      %1705 = vmatprep.subr.mxu0 0.0
      %1706 = vmatpush2.msra.mxu0 %v1187
      %1707 = vmatprep.subr.mxu0 0.0
      %1708 = vmatpush2.msra.mxu0 %v1186
      %1709 = vmatprep.subr.mxu0 0.0
      %1710 = vmatpush2.msra.mxu0 %v1185
      %1711 = vmatprep.subr.mxu0 0.0
      %1712 = vmatpush2.msra.mxu0 %v1184
      %1713 = vmatprep.subr.mxu0 0.0
      %1714 = vmatpush2.msra.mxu0 %v1183
      %1715 = vmatprep.subr.mxu0 0.0
      %1716 = vmatpush2.msra.mxu0 %v1182
      %1717 = vmatprep.subr.mxu0 0.0
      %1718 = vmatpush2.msra.mxu0 %v1181
      %1719 = vmatprep.subr.mxu0 0.0
      %1720 = vmatpush2.msra.mxu0 %v1180
      %1721 = vmatprep.subr.mxu0 0.0
      %1722 = vmatpush2.msra.mxu0 %v1179
      %1723 = vmatprep.subr.mxu0 0.0
      %1724 = vmatpush2.msra.mxu0 %v1178
      %1725 = vmatprep.subr.mxu0 0.0
      %1726 = vmatpush2.msra.mxu0 %v1177
      %1727 = vmatprep.subr.mxu0 0.0
      %1728 = vmatpush2.msra.mxu0 %v1176
      %1729 = vmatprep.subr.mxu0 0.0
      %1730 = vmatpush2.msra.mxu0 %v1175
      %1731 = vmatprep.subr.mxu0 0.0
      %1732 = vmatpush2.msra.mxu0 %v1174
      %1733 = vmatprep.mubr.f32.mxu0 %v1093
      %1734 = vmatmul.mubr.f32.gmra.mxu0 %v1068
      %v1735 = vpop.f32.mrf.mxu0
      %v1736 = vadd.f32 %v1666, %v1735
      %v1737 = vpop.f32.mrf.mxu0
      %1738 = vdwg.mxu0
      %v1739 = vld [vmem:[%s5] sm:$0x1]
      %v1741 = vlaneseq
      %v1742 = vshrl.u32 %v1741, 7
      %v1743 = vsub.s32 0, %v1742
      %v1744 = vrot.slane %v1739, %v1743
      %v1746 = vadd.f32 %v1736, %v1744
      %1747 = vst [vmem:[#allocation11] sm:$0x3] %v1746
    $region49: #{tpu_custom_call.1} parent=1 // pred_fallthru
      _
    // Predicated region
    $region50: #{tpu_custom_call.1} parent=1 // pred_check
      _
    $region51: #{tpu_custom_call.1} parent=1 // pred_check_branch
      %1749 = sbr.rel (0) target = $region53
    $region52: #{tpu_custom_call.1} parent=1 // pred_region
      %s1751 = ssub.s32 32, 32
      %1752 = vsyncadd [#allocation5], %s1751
      %s1754 = sshll.u32 [#allocation11], 4
      %s1755 = int_to_ptr.vmem [resolvable:$true] %s1754
      %1757 = dma.vmem_to_hbm [thread:$0]  %s1755, 32, %s6, [#allocation5]
    $region53: #{tpu_custom_call.1} parent=1 // pred_fallthru
      _
    // Predicated region
    $region54: #{tpu_custom_call.1} parent=1 // pred_check
      _
    $region55: #{tpu_custom_call.1} parent=1 // pred_check_branch
      %1759 = sbr.rel (0) target = $region57
    $region56: #{tpu_custom_call.1} parent=1 // pred_region
      %1760 = dma.done [#allocation5], 32
    $region57: #{tpu_custom_call.1} parent=1 // pred_fallthru
      _
    %1761 = vsyncpa [#allocation4], 1
    %1762 = vsyncpa [#allocation7], 1
    %1763 = vsyncpa [#allocation10], 1
    %1764 = vsyncpa [#allocation5], 1

</llo_original>
